<compile_context>
chip_gen: v5e
topology: v5e:2x2
jax: 0.10.0
libtpu: 0.0.40
codegen_flags: <defaults>
</compile_context>

<pallas_src>
import functools

import jax
import jax.numpy as jnp
from jax import lax
from jax.experimental import pallas as pl
from jax.experimental.pallas import tpu as pltpu

EPS = 1e-5  # torch.nn.LayerNorm default


def _layernorm(x, g, b):
    # x: (N, D); g, b: (D,)  — biased variance, matching torch.nn.LayerNorm. All f32.
    mu = jnp.mean(x, axis=-1, keepdims=True)
    var = jnp.mean((x - mu) ** 2, axis=-1, keepdims=True)
    return (x - mu) * jax.lax.rsqrt(var + EPS) * g + b


# ------------------------- kernels -------------------------

def layer_kernel(x_ref, ln1g_ref, ln1b_ref, wqkv_ref, wo_ref, bo_ref,
                 ln2g_ref, ln2b_ref, w1_ref, b1_ref, w2_ref, b2_ref,
                 lnfg_ref, lnfb_ref, y_ref, *, heads, dim_head,
                 matmul_dtype, apply_final_ln):
    """One full transformer layer for one batch element.

    y = LNf?( z + FFN(LN2(z)) )   where   z = x + Attn(LN1(x))
    """
    inner = heads * dim_head
    x = x_ref[0].astype(jnp.float32)                                   # (N, D) residual, f32
    n, d = x.shape

    # ---------- PreNorm attention + residual ----------
    h = _layernorm(x, ln1g_ref[0], ln1b_ref[0])                        # (N, D), f32
    # Single fused lane-dense QKV projection (wq already carries the 1/sqrt(Dh) scale).
    qkv = jnp.dot(h.astype(matmul_dtype), wqkv_ref[...],
                  preferred_element_type=jnp.float32)                  # (N, 3*inner), f32 acc

    attn_out = jnp.zeros((n, d), jnp.float32)
    # TODO(synk): at production shapes (dim_head % 128 == 0, large N) replace this
    # statically unrolled per-head loop over 8-lane slices with one head-batched
    # dot_general + flash-style online softmax.
    for hh in range(heads):                                            # static unroll
        lo = hh * dim_head
        q = qkv[:, lo:lo + dim_head].astype(matmul_dtype)              # (N, Dh)
        k = qkv[:, inner + lo:inner + lo + dim_head].astype(matmul_dtype)
        v = qkv[:, 2 * inner + lo:2 * inner + lo + dim_head].astype(matmul_dtype)
        # q @ k.T via dimension numbers — no transposed copy of k.
        s = lax.dot_general(q, k, (((1,), (1,)), ((), ())),
                            preferred_element_type=jnp.float32)        # (N, N), f32
        s = s - jnp.max(s, axis=-1, keepdims=True)
        p = jnp.exp(s)                                                 # EUP, f32
        p = p * pl.reciprocal(jnp.sum(p, axis=-1, keepdims=True), approx=True)
        o_h = jnp.dot(p.astype(matmul_dtype), v,
                      preferred_element_type=jnp.float32)              # (N, Dh)
        # Accumulate this head through its (sublane-aligned) row slice of wo;
        # avoids a lane-axis concat of H sub-128-lane tiles and keeps D lane-dense.
        attn_out = attn_out + jnp.dot(o_h.astype(matmul_dtype),
                                      wo_ref[lo:lo + dim_head, :],
                                      preferred_element_type=jnp.float32)  # (N, D)

    x = x + attn_out + bo_ref[0]

    # ---------- PreNorm feed-forward + residual ----------
    h2 = _layernorm(x, ln2g_ref[0], ln2b_ref[0])
    mid = jnp.tanh(jnp.dot(h2.astype(matmul_dtype), w1_ref[...],
                           preferred_element_type=jnp.float32) + b1_ref[0])   # f32 tanh
    x = x + jnp.dot(mid.astype(matmul_dtype), w2_ref[...],
                    preferred_element_type=jnp.float32) + b2_ref[0]

    if apply_final_ln:                                                 # static (last layer)
        x = _layernorm(x, lnfg_ref[0], lnfb_ref[0])

    # TODO(synk): for small-D configs (D < 128) this store is a masked vst.msk; present a
    # lane-dense output (pad D to 128 / fold B*N onto the lane axis) if D stays small.
    y_ref[0] = x.astype(y_ref.dtype)


def layernorm_kernel(x_ref, g_ref, b_ref, y_ref):
    y_ref[0] = _layernorm(x_ref[0].astype(jnp.float32),
                          g_ref[0], b_ref[0]).astype(y_ref.dtype)


# ------------------------- wrappers -------------------------

def _vec(v):
    return v.reshape(1, -1)   # present 1-D params as (1, D) for TPU layout


def prepare_params(params, *, heads, dim_head, matmul_dtype=jnp.bfloat16):
    """Pre-materialize fused, lane-dense weight slabs ONCE (outside the forward path).

    The attention scale (dim_head**-0.5) is folded into wq in f32 BEFORE casting
    the slab to the matmul dtype.
    """
    scale = dim_head ** (-0.5)
    layers = []
    for p in params["layers"]:
        wqkv = jnp.concatenate([p["wq"] * scale, p["wk"], p["wv"]], axis=1)  # (D, 3*inner)
        layers.append(dict(
            ln1_g=p["ln1_g"], ln1_b=p["ln1_b"],
            wqkv=wqkv.astype(matmul_dtype),
            wo=p["wo"].astype(matmul_dtype),
            bo=p["bo"],
            ln2_g=p["ln2_g"], ln2_b=p["ln2_b"],
            w1=p["w1"].astype(matmul_dtype),
            b1=p["b1"],
            w2=p["w2"].astype(matmul_dtype),
            b2=p["b2"],
        ))
    return dict(layers=layers, ln_g=params["ln_g"], ln_b=params["ln_b"],
                matmul_dtype=matmul_dtype)


def transformer_layer(x, p, lnf_g, lnf_b, *, heads, dim_head, matmul_dtype,
                      apply_final_ln):
    B, N, D = x.shape
    inner = heads * dim_head
    mlp = p["w1"].shape[1]

    flops = B * (2 * N * D * 3 * inner            # qkv projection
                 + 4 * heads * N * N * dim_head   # q@k.T and attn@v
                 + 2 * N * inner * D              # output projection
                 + 4 * N * D * mlp)               # FFN
    transcendentals = B * (heads * N * N + N * mlp)
    wbytes = int(p["wqkv"].size + p["wo"].size + p["w1"].size + p["w2"].size) \
        * jnp.dtype(matmul_dtype).itemsize
    bytes_accessed = 2 * B * N * D * 4 + wbytes + 4 * (8 * D + mlp)

    kernel = functools.partial(layer_kernel, heads=heads, dim_head=dim_head,
                               matmul_dtype=matmul_dtype,
                               apply_final_ln=apply_final_ln)
    vec_d = pl.BlockSpec((1, D), lambda b: (0, 0))

    def w_spec(shape):
        # Grid-invariant weight slab (same block every grid step).
        # TODO(synk): pipeline_mode=pl.Buffered(1) here at production sizes.
        return pl.BlockSpec(shape, lambda b: (0, 0))

    return pl.pallas_call(
        kernel,
        out_shape=jax.ShapeDtypeStruct((B, N, D), x.dtype),
        grid=(B,),
        in_specs=[
            pl.BlockSpec((1, N, D), lambda b: (b, 0, 0)),       # x
            vec_d, vec_d,                                       # ln1 gamma / beta
            w_spec((D, 3 * inner)),                             # wqkv (lane-dense, bf16)
            w_spec((inner, D)),                                 # wo   (lane-dense, bf16)
            vec_d,                                              # bo (f32)
            vec_d, vec_d,                                       # ln2 gamma / beta
            w_spec((D, mlp)),                                   # w1 (bf16)
            pl.BlockSpec((1, mlp), lambda b: (0, 0)),           # b1 (f32)
            w_spec((mlp, D)),                                   # w2 (bf16)
            vec_d,                                              # b2 (f32)
            vec_d, vec_d,                                       # final LN gamma / beta
        ],
        out_specs=pl.BlockSpec((1, N, D), lambda b: (b, 0, 0)),
        compiler_params=pltpu.CompilerParams(
            # TODO(synk): on v7x use pltpu.CORE_PARALLEL here to split batch across
            # the two TensorCores; plain "parallel" vs "arbitrary" is near-neutral.
            dimension_semantics=("parallel",)),
        cost_estimate=pl.CostEstimate(flops=flops,
                                      transcendentals=transcendentals,
                                      bytes_accessed=bytes_accessed),
    )(x, _vec(p["ln1_g"]), _vec(p["ln1_b"]), p["wqkv"], p["wo"], _vec(p["bo"]),
      _vec(p["ln2_g"]), _vec(p["ln2_b"]), p["w1"], _vec(p["b1"]), p["w2"], _vec(p["b2"]),
      _vec(lnf_g), _vec(lnf_b))


def final_layernorm(x, gamma, beta):
    # Only used when depth == 0 (otherwise fused into the last layer's kernel).
    B, N, D = x.shape
    return pl.pallas_call(
        layernorm_kernel,
        out_shape=jax.ShapeDtypeStruct((B, N, D), x.dtype),
        grid=(B,),
        in_specs=[pl.BlockSpec((1, N, D), lambda b: (b, 0, 0)),
                  pl.BlockSpec((1, D), lambda b: (0, 0)),
                  pl.BlockSpec((1, D), lambda b: (0, 0))],
        out_specs=pl.BlockSpec((1, N, D), lambda b: (b, 0, 0)),
        compiler_params=pltpu.CompilerParams(dimension_semantics=("parallel",)),
    )(x, _vec(gamma), _vec(beta))


def transformer_forward(x, prepared, *, heads, dim_head):
    layers = prepared["layers"]
    mm = prepared["matmul_dtype"]
    if not layers:
        return final_layernorm(x, prepared["ln_g"], prepared["ln_b"])
    for i, p in enumerate(layers):
        x = transformer_layer(x, p, prepared["ln_g"], prepared["ln_b"],
                              heads=heads, dim_head=dim_head, matmul_dtype=mm,
                              apply_final_ln=(i == len(layers) - 1))
    return x


# ------------------------- pure-JAX reference -------------------------

def _ref_ln(x, g, b):
    mu = x.mean(-1, keepdims=True)
    var = ((x - mu) ** 2).mean(-1, keepdims=True)
    return (x - mu) / jnp.sqrt(var + EPS) * g + b


def ref_forward(x, params, *, heads, dim_head):
    B, N, D = x.shape
    for p in params["layers"]:
        h = _ref_ln(x, p["ln1_g"], p["ln1_b"])
        q = (h @ p["wq"]).reshape(B, N, heads, dim_head).transpose(0, 2, 1, 3)
        k = (h @ p["wk"]).reshape(B, N, heads, dim_head).transpose(0, 2, 1, 3)
        v = (h @ p["wv"]).reshape(B, N, heads, dim_head).transpose(0, 2, 1, 3)
        attn = jax.nn.softmax(jnp.einsum("bhnd,bhmd->bhnm", q, k) * dim_head ** -0.5, -1)
        o = jnp.einsum("bhnm,bhmd->bhnd", attn, v)
        o = o.transpose(0, 2, 1, 3).reshape(B, N, heads * dim_head)
        x = o @ p["wo"] + p["bo"] + x
        h = _ref_ln(x, p["ln2_g"], p["ln2_b"])
        x = jnp.tanh(h @ p["w1"] + p["b1"]) @ p["w2"] + p["b2"] + x
    return _ref_ln(x, params["ln_g"], params["ln_b"])


# ------------------------- setup & run -------------------------

def make_params(key, dim, depth, heads, dim_head, mlp_dim):
    # Note: when heads == 1 and dim_head == dim the torch module uses Identity for
    # to_out; that case maps to wo = I, bo = 0 with this parameterization.
    inner = heads * dim_head
    layers = []
    for _ in range(depth):
        key, *ks = jax.random.split(key, 7)
        layers.append(dict(
            ln1_g=jnp.ones((dim,), jnp.float32),
            ln1_b=jnp.zeros((dim,), jnp.float32),
            wq=jax.random.normal(ks[0], (dim, inner), jnp.float32) * 0.1,
            wk=jax.random.normal(ks[1], (dim, inner), jnp.float32) * 0.1,
            wv=jax.random.normal(ks[2], (dim, inner), jnp.float32) * 0.1,
            wo=jax.random.normal(ks[3], (inner, dim), jnp.float32) * 0.1,
            bo=jnp.zeros((dim,), jnp.float32),
            ln2_g=jnp.ones((dim,), jnp.float32),
            ln2_b=jnp.zeros((dim,), jnp.float32),
            w1=jax.random.normal(ks[4], (dim, mlp_dim), jnp.float32) * 0.1,
            b1=jnp.zeros((mlp_dim,), jnp.float32),
            w2=jax.random.normal(ks[5], (mlp_dim, dim), jnp.float32) * 0.1,
            b2=jnp.zeros((dim,), jnp.float32),
        ))
    return dict(layers=layers,
                ln_g=jnp.ones((dim,), jnp.float32),
                ln_b=jnp.zeros((dim,), jnp.float32)), key


if __name__ == "__main__":
    B, N = 2, 8
    dim, depth, heads, dim_head, mlp_dim = 32, 2, 4, 8, 64

    key = jax.random.PRNGKey(0)
    params, key = make_params(key, dim, depth, heads, dim_head, mlp_dim)
    key, kx = jax.random.split(key)
    x = jax.random.normal(kx, (B, N, dim), jnp.float32)

    ref = jax.block_until_ready(ref_forward(x, params, heads=heads, dim_head=dim_head))

    # Exact-arithmetic path (f32 matmul operands): tight check against f32 reference.
    prep_f32 = prepare_params(params, heads=heads, dim_head=dim_head,
                              matmul_dtype=jnp.float32)
    out_f32 = jax.block_until_ready(
        transformer_forward(x, prep_f32, heads=heads, dim_head=dim_head))
    assert out_f32.shape == (B, N, dim)
    assert jnp.allclose(out_f32, ref, rtol=2e-3, atol=2e-3), \
        f"f32 max abs diff = {jnp.max(jnp.abs(out_f32 - ref))}"

    # Production path (bf16 matmul operands, f32 accumulation): looser check.
    prep_bf16 = prepare_params(params, heads=heads, dim_head=dim_head,
                               matmul_dtype=jnp.bfloat16)
    out_bf16 = jax.block_until_ready(
        transformer_forward(x, prep_bf16, heads=heads, dim_head=dim_head))
    assert out_bf16.shape == (B, N, dim)
    assert jnp.allclose(out_bf16, ref, rtol=1e-1, atol=1e-1), \
        f"bf16 max abs diff = {jnp.max(jnp.abs(out_bf16 - ref))}"

    print("KERNEL_OK")
</pallas_src>

<mosaic_0001>
module attributes {stable_mosaic.version = 11 : i64} {
  func.func @layer_kernel(%arg0: i32, %arg1: memref<1x8x32xf32, #tpu.memory_space<vmem>>, %arg2: memref<1x32xf32, #tpu.memory_space<vmem>>, %arg3: memref<1x32xf32, #tpu.memory_space<vmem>>, %arg4: memref<32x96xf32, #tpu.memory_space<vmem>>, %arg5: memref<32x32xf32, #tpu.memory_space<vmem>>, %arg6: memref<1x32xf32, #tpu.memory_space<vmem>>, %arg7: memref<1x32xf32, #tpu.memory_space<vmem>>, %arg8: memref<1x32xf32, #tpu.memory_space<vmem>>, %arg9: memref<32x64xf32, #tpu.memory_space<vmem>>, %arg10: memref<1x64xf32, #tpu.memory_space<vmem>>, %arg11: memref<64x32xf32, #tpu.memory_space<vmem>>, %arg12: memref<1x32xf32, #tpu.memory_space<vmem>>, %arg13: memref<1x32xf32, #tpu.memory_space<vmem>>, %arg14: memref<1x32xf32, #tpu.memory_space<vmem>>, %arg15: memref<1x8x32xf32, #tpu.memory_space<vmem>>) attributes {dimension_semantics = [#tpu.dimension_semantics<parallel>], iteration_bounds = array<i64: 2>, scalar_prefetch = 0 : i64, scratch_operands = 0 : i64, tpu.core_type = #tpu.core_type<tc>, window_params = [{transform_indices = @transform_0, window_bounds = array<i64: 1, 8, 32>}, {pipeline_mode = #tpu.pipeline_mode<synchronous>, transform_indices = @transform_1, window_bounds = array<i64: 1, 32>}, {pipeline_mode = #tpu.pipeline_mode<synchronous>, transform_indices = @transform_2, window_bounds = array<i64: 1, 32>}, {pipeline_mode = #tpu.pipeline_mode<synchronous>, transform_indices = @transform_3, window_bounds = array<i64: 32, 96>}, {pipeline_mode = #tpu.pipeline_mode<synchronous>, transform_indices = @transform_4, window_bounds = array<i64: 32, 32>}, {pipeline_mode = #tpu.pipeline_mode<synchronous>, transform_indices = @transform_5, window_bounds = array<i64: 1, 32>}, {pipeline_mode = #tpu.pipeline_mode<synchronous>, transform_indices = @transform_6, window_bounds = array<i64: 1, 32>}, {pipeline_mode = #tpu.pipeline_mode<synchronous>, transform_indices = @transform_7, window_bounds = array<i64: 1, 32>}, {pipeline_mode = #tpu.pipeline_mode<synchronous>, transform_indices = @transform_8, window_bounds = array<i64: 32, 64>}, {pipeline_mode = #tpu.pipeline_mode<synchronous>, transform_indices = @transform_9, window_bounds = array<i64: 1, 64>}, {pipeline_mode = #tpu.pipeline_mode<synchronous>, transform_indices = @transform_10, window_bounds = array<i64: 64, 32>}, {pipeline_mode = #tpu.pipeline_mode<synchronous>, transform_indices = @transform_11, window_bounds = array<i64: 1, 32>}, {pipeline_mode = #tpu.pipeline_mode<synchronous>, transform_indices = @transform_12, window_bounds = array<i64: 1, 32>}, {pipeline_mode = #tpu.pipeline_mode<synchronous>, transform_indices = @transform_13, window_bounds = array<i64: 1, 32>}, {transform_indices = @transform_14, window_bounds = array<i64: 1, 8, 32>}]} {
    %c0 = arith.constant 0 : index
    %c0_0 = arith.constant 0 : index
    %c0_1 = arith.constant 0 : index
    %0 = vector.load %arg1[%c0, %c0_0, %c0_1] : memref<1x8x32xf32, #tpu.memory_space<vmem>>, vector<1x8x32xf32>
    %1 = vector.shape_cast %0 : vector<1x8x32xf32> to vector<8x32xf32>
    %c0_2 = arith.constant 0 : index
    %c0_3 = arith.constant 0 : index
    %2 = vector.load %arg2[%c0_2, %c0_3] : memref<1x32xf32, #tpu.memory_space<vmem>>, vector<1x32xf32>
    %3 = vector.shape_cast %2 : vector<1x32xf32> to vector<32xf32>
    %c0_4 = arith.constant 0 : index
    %c0_5 = arith.constant 0 : index
    %4 = vector.load %arg3[%c0_4, %c0_5] : memref<1x32xf32, #tpu.memory_space<vmem>>, vector<1x32xf32>
    %5 = vector.shape_cast %4 : vector<1x32xf32> to vector<32xf32>
    %cst = arith.constant dense<0.000000e+00> : vector<8xf32>
    %6 = vector.multi_reduction <add>, %1, %cst [1] : vector<8x32xf32> to vector<8xf32>
    %7 = vector.shape_cast %6 : vector<8xf32> to vector<8x1xf32>
    %cst_6 = arith.constant 3.200000e+01 : f32
    %8 = vector.broadcast %cst_6 : f32 to vector<8x1xf32>
    %9 = arith.divf %7, %8 : vector<8x1xf32>
    %10 = vector.broadcast %9 : vector<8x1xf32> to vector<8x32xf32>
    %11 = arith.subf %1, %10 : vector<8x32xf32>
    %12 = arith.mulf %11, %11 : vector<8x32xf32>
    %cst_7 = arith.constant dense<0.000000e+00> : vector<8xf32>
    %13 = vector.multi_reduction <add>, %12, %cst_7 [1] : vector<8x32xf32> to vector<8xf32>
    %14 = vector.shape_cast %13 : vector<8xf32> to vector<8x1xf32>
    %cst_8 = arith.constant 3.200000e+01 : f32
    %15 = vector.broadcast %cst_8 : f32 to vector<8x1xf32>
    %16 = arith.divf %14, %15 : vector<8x1xf32>
    %17 = vector.broadcast %9 : vector<8x1xf32> to vector<8x32xf32>
    %18 = arith.subf %1, %17 : vector<8x32xf32>
    %cst_9 = arith.constant 9.99999974E-6 : f32
    %19 = vector.broadcast %cst_9 : f32 to vector<8x1xf32>
    %20 = arith.addf %16, %19 : vector<8x1xf32>
    %21 = math.rsqrt %20 : vector<8x1xf32>
    %22 = vector.broadcast %21 : vector<8x1xf32> to vector<8x32xf32>
    %23 = arith.mulf %18, %22 : vector<8x32xf32>
    %24 = vector.shape_cast %3 : vector<32xf32> to vector<1x32xf32>
    %25 = vector.broadcast %24 : vector<1x32xf32> to vector<8x32xf32>
    %26 = arith.mulf %23, %25 : vector<8x32xf32>
    %27 = vector.shape_cast %5 : vector<32xf32> to vector<1x32xf32>
    %28 = vector.broadcast %27 : vector<1x32xf32> to vector<8x32xf32>
    %29 = arith.addf %26, %28 : vector<8x32xf32>
    %c0_10 = arith.constant 0 : index
    %c0_11 = arith.constant 0 : index
    %30 = vector.load %arg4[%c0_10, %c0_11] : memref<32x96xf32, #tpu.memory_space<vmem>>, vector<32x96xf32>
    %cst_12 = arith.constant dense<0.000000e+00> : vector<8x96xf32>
    %31 = tpu.matmul %29, %30, %cst_12 {dimension_numbers = #tpu.dot_dimension_numbers<[1], [0], [0], [1], [0, 0, 1, 1], [], []>} : vector<8x32xf32>, vector<32x96xf32>, vector<8x96xf32> -> vector<8x96xf32>
    %cst_13 = arith.constant 0.000000e+00 : f32
    %32 = vector.broadcast %cst_13 : f32 to vector<8x32xf32>
    %33 = vector.extract_strided_slice %31 {offsets = [0, 0], sizes = [8, 8], strides = [1, 1]} : vector<8x96xf32> to vector<8x8xf32>
    %34 = vector.extract_strided_slice %31 {offsets = [0, 32], sizes = [8, 8], strides = [1, 1]} : vector<8x96xf32> to vector<8x8xf32>
    %35 = vector.extract_strided_slice %31 {offsets = [0, 64], sizes = [8, 8], strides = [1, 1]} : vector<8x96xf32> to vector<8x8xf32>
    %cst_14 = arith.constant dense<0.000000e+00> : vector<8x8xf32>
    %36 = tpu.matmul %33, %34, %cst_14 {dimension_numbers = #tpu.dot_dimension_numbers<[1], [1], [0], [0], [0, 0, 1, 0], [], []>} : vector<8x8xf32>, vector<8x8xf32>, vector<8x8xf32> -> vector<8x8xf32>
    %cst_15 = arith.constant dense<0xFF800000> : vector<8xf32>
    %37 = vector.multi_reduction <maximumf>, %36, %cst_15 [1] : vector<8x8xf32> to vector<8xf32>
    %38 = vector.shape_cast %37 : vector<8xf32> to vector<8x1xf32>
    %39 = vector.broadcast %38 : vector<8x1xf32> to vector<8x8xf32>
    %40 = arith.subf %36, %39 : vector<8x8xf32>
    %41 = math.exp %40 : vector<8x8xf32>
    %cst_16 = arith.constant dense<0.000000e+00> : vector<8xf32>
    %42 = vector.multi_reduction <add>, %41, %cst_16 [1] : vector<8x8xf32> to vector<8xf32>
    %43 = vector.shape_cast %42 : vector<8xf32> to vector<8x1xf32>
    %44 = tpu.reciprocal %43 {approx = true} : vector<8x1xf32> -> vector<8x1xf32>
    %45 = vector.broadcast %44 : vector<8x1xf32> to vector<8x8xf32>
    %46 = arith.mulf %41, %45 : vector<8x8xf32>
    %cst_17 = arith.constant dense<0.000000e+00> : vector<8x8xf32>
    %47 = tpu.matmul %46, %35, %cst_17 {dimension_numbers = #tpu.dot_dimension_numbers<[1], [0], [0], [1], [0, 0, 1, 1], [], []>} : vector<8x8xf32>, vector<8x8xf32>, vector<8x8xf32> -> vector<8x8xf32>
    %c0_18 = arith.constant 0 : index
    %c0_19 = arith.constant 0 : index
    %48 = vector.load %arg5[%c0_18, %c0_19] : memref<32x32xf32, #tpu.memory_space<vmem>>, vector<8x32xf32>
    %cst_20 = arith.constant dense<0.000000e+00> : vector<8x32xf32>
    %49 = tpu.matmul %47, %48, %cst_20 {dimension_numbers = #tpu.dot_dimension_numbers<[1], [0], [0], [1], [0, 0, 1, 1], [], []>} : vector<8x8xf32>, vector<8x32xf32>, vector<8x32xf32> -> vector<8x32xf32>
    %50 = arith.addf %32, %49 : vector<8x32xf32>
    %51 = vector.extract_strided_slice %31 {offsets = [0, 8], sizes = [8, 8], strides = [1, 1]} : vector<8x96xf32> to vector<8x8xf32>
    %52 = vector.extract_strided_slice %31 {offsets = [0, 40], sizes = [8, 8], strides = [1, 1]} : vector<8x96xf32> to vector<8x8xf32>
    %53 = vector.extract_strided_slice %31 {offsets = [0, 72], sizes = [8, 8], strides = [1, 1]} : vector<8x96xf32> to vector<8x8xf32>
    %cst_21 = arith.constant dense<0.000000e+00> : vector<8x8xf32>
    %54 = tpu.matmul %51, %52, %cst_21 {dimension_numbers = #tpu.dot_dimension_numbers<[1], [1], [0], [0], [0, 0, 1, 0], [], []>} : vector<8x8xf32>, vector<8x8xf32>, vector<8x8xf32> -> vector<8x8xf32>
    %cst_22 = arith.constant dense<0xFF800000> : vector<8xf32>
    %55 = vector.multi_reduction <maximumf>, %54, %cst_22 [1] : vector<8x8xf32> to vector<8xf32>
    %56 = vector.shape_cast %55 : vector<8xf32> to vector<8x1xf32>
    %57 = vector.broadcast %56 : vector<8x1xf32> to vector<8x8xf32>
    %58 = arith.subf %54, %57 : vector<8x8xf32>
    %59 = math.exp %58 : vector<8x8xf32>
    %cst_23 = arith.constant dense<0.000000e+00> : vector<8xf32>
    %60 = vector.multi_reduction <add>, %59, %cst_23 [1] : vector<8x8xf32> to vector<8xf32>
    %61 = vector.shape_cast %60 : vector<8xf32> to vector<8x1xf32>
    %62 = tpu.reciprocal %61 {approx = true} : vector<8x1xf32> -> vector<8x1xf32>
    %63 = vector.broadcast %62 : vector<8x1xf32> to vector<8x8xf32>
    %64 = arith.mulf %59, %63 : vector<8x8xf32>
    %cst_24 = arith.constant dense<0.000000e+00> : vector<8x8xf32>
    %65 = tpu.matmul %64, %53, %cst_24 {dimension_numbers = #tpu.dot_dimension_numbers<[1], [0], [0], [1], [0, 0, 1, 1], [], []>} : vector<8x8xf32>, vector<8x8xf32>, vector<8x8xf32> -> vector<8x8xf32>
    %c8 = arith.constant 8 : index
    %c0_25 = arith.constant 0 : index
    %66 = vector.load %arg5[%c8, %c0_25] : memref<32x32xf32, #tpu.memory_space<vmem>>, vector<8x32xf32>
    %cst_26 = arith.constant dense<0.000000e+00> : vector<8x32xf32>
    %67 = tpu.matmul %65, %66, %cst_26 {dimension_numbers = #tpu.dot_dimension_numbers<[1], [0], [0], [1], [0, 0, 1, 1], [], []>} : vector<8x8xf32>, vector<8x32xf32>, vector<8x32xf32> -> vector<8x32xf32>
    %68 = arith.addf %50, %67 : vector<8x32xf32>
    %69 = vector.extract_strided_slice %31 {offsets = [0, 16], sizes = [8, 8], strides = [1, 1]} : vector<8x96xf32> to vector<8x8xf32>
    %70 = vector.extract_strided_slice %31 {offsets = [0, 48], sizes = [8, 8], strides = [1, 1]} : vector<8x96xf32> to vector<8x8xf32>
    %71 = vector.extract_strided_slice %31 {offsets = [0, 80], sizes = [8, 8], strides = [1, 1]} : vector<8x96xf32> to vector<8x8xf32>
    %cst_27 = arith.constant dense<0.000000e+00> : vector<8x8xf32>
    %72 = tpu.matmul %69, %70, %cst_27 {dimension_numbers = #tpu.dot_dimension_numbers<[1], [1], [0], [0], [0, 0, 1, 0], [], []>} : vector<8x8xf32>, vector<8x8xf32>, vector<8x8xf32> -> vector<8x8xf32>
    %cst_28 = arith.constant dense<0xFF800000> : vector<8xf32>
    %73 = vector.multi_reduction <maximumf>, %72, %cst_28 [1] : vector<8x8xf32> to vector<8xf32>
    %74 = vector.shape_cast %73 : vector<8xf32> to vector<8x1xf32>
    %75 = vector.broadcast %74 : vector<8x1xf32> to vector<8x8xf32>
    %76 = arith.subf %72, %75 : vector<8x8xf32>
    %77 = math.exp %76 : vector<8x8xf32>
    %cst_29 = arith.constant dense<0.000000e+00> : vector<8xf32>
    %78 = vector.multi_reduction <add>, %77, %cst_29 [1] : vector<8x8xf32> to vector<8xf32>
    %79 = vector.shape_cast %78 : vector<8xf32> to vector<8x1xf32>
    %80 = tpu.reciprocal %79 {approx = true} : vector<8x1xf32> -> vector<8x1xf32>
    %81 = vector.broadcast %80 : vector<8x1xf32> to vector<8x8xf32>
    %82 = arith.mulf %77, %81 : vector<8x8xf32>
    %cst_30 = arith.constant dense<0.000000e+00> : vector<8x8xf32>
    %83 = tpu.matmul %82, %71, %cst_30 {dimension_numbers = #tpu.dot_dimension_numbers<[1], [0], [0], [1], [0, 0, 1, 1], [], []>} : vector<8x8xf32>, vector<8x8xf32>, vector<8x8xf32> -> vector<8x8xf32>
    %c16 = arith.constant 16 : index
    %c0_31 = arith.constant 0 : index
    %84 = vector.load %arg5[%c16, %c0_31] : memref<32x32xf32, #tpu.memory_space<vmem>>, vector<8x32xf32>
    %cst_32 = arith.constant dense<0.000000e+00> : vector<8x32xf32>
    %85 = tpu.matmul %83, %84, %cst_32 {dimension_numbers = #tpu.dot_dimension_numbers<[1], [0], [0], [1], [0, 0, 1, 1], [], []>} : vector<8x8xf32>, vector<8x32xf32>, vector<8x32xf32> -> vector<8x32xf32>
    %86 = arith.addf %68, %85 : vector<8x32xf32>
    %87 = vector.extract_strided_slice %31 {offsets = [0, 24], sizes = [8, 8], strides = [1, 1]} : vector<8x96xf32> to vector<8x8xf32>
    %88 = vector.extract_strided_slice %31 {offsets = [0, 56], sizes = [8, 8], strides = [1, 1]} : vector<8x96xf32> to vector<8x8xf32>
    %89 = vector.extract_strided_slice %31 {offsets = [0, 88], sizes = [8, 8], strides = [1, 1]} : vector<8x96xf32> to vector<8x8xf32>
    %cst_33 = arith.constant dense<0.000000e+00> : vector<8x8xf32>
    %90 = tpu.matmul %87, %88, %cst_33 {dimension_numbers = #tpu.dot_dimension_numbers<[1], [1], [0], [0], [0, 0, 1, 0], [], []>} : vector<8x8xf32>, vector<8x8xf32>, vector<8x8xf32> -> vector<8x8xf32>
    %cst_34 = arith.constant dense<0xFF800000> : vector<8xf32>
    %91 = vector.multi_reduction <maximumf>, %90, %cst_34 [1] : vector<8x8xf32> to vector<8xf32>
    %92 = vector.shape_cast %91 : vector<8xf32> to vector<8x1xf32>
    %93 = vector.broadcast %92 : vector<8x1xf32> to vector<8x8xf32>
    %94 = arith.subf %90, %93 : vector<8x8xf32>
    %95 = math.exp %94 : vector<8x8xf32>
    %cst_35 = arith.constant dense<0.000000e+00> : vector<8xf32>
    %96 = vector.multi_reduction <add>, %95, %cst_35 [1] : vector<8x8xf32> to vector<8xf32>
    %97 = vector.shape_cast %96 : vector<8xf32> to vector<8x1xf32>
    %98 = tpu.reciprocal %97 {approx = true} : vector<8x1xf32> -> vector<8x1xf32>
    %99 = vector.broadcast %98 : vector<8x1xf32> to vector<8x8xf32>
    %100 = arith.mulf %95, %99 : vector<8x8xf32>
    %cst_36 = arith.constant dense<0.000000e+00> : vector<8x8xf32>
    %101 = tpu.matmul %100, %89, %cst_36 {dimension_numbers = #tpu.dot_dimension_numbers<[1], [0], [0], [1], [0, 0, 1, 1], [], []>} : vector<8x8xf32>, vector<8x8xf32>, vector<8x8xf32> -> vector<8x8xf32>
    %c24 = arith.constant 24 : index
    %c0_37 = arith.constant 0 : index
    %102 = vector.load %arg5[%c24, %c0_37] : memref<32x32xf32, #tpu.memory_space<vmem>>, vector<8x32xf32>
    %cst_38 = arith.constant dense<0.000000e+00> : vector<8x32xf32>
    %103 = tpu.matmul %101, %102, %cst_38 {dimension_numbers = #tpu.dot_dimension_numbers<[1], [0], [0], [1], [0, 0, 1, 1], [], []>} : vector<8x8xf32>, vector<8x32xf32>, vector<8x32xf32> -> vector<8x32xf32>
    %104 = arith.addf %86, %103 : vector<8x32xf32>
    %105 = arith.addf %1, %104 : vector<8x32xf32>
    %c0_39 = arith.constant 0 : index
    %c0_40 = arith.constant 0 : index
    %106 = vector.load %arg6[%c0_39, %c0_40] : memref<1x32xf32, #tpu.memory_space<vmem>>, vector<1x32xf32>
    %107 = vector.shape_cast %106 : vector<1x32xf32> to vector<32xf32>
    %108 = vector.shape_cast %107 : vector<32xf32> to vector<1x32xf32>
    %109 = vector.broadcast %108 : vector<1x32xf32> to vector<8x32xf32>
    %110 = arith.addf %105, %109 : vector<8x32xf32>
    %c0_41 = arith.constant 0 : index
    %c0_42 = arith.constant 0 : index
    %111 = vector.load %arg7[%c0_41, %c0_42] : memref<1x32xf32, #tpu.memory_space<vmem>>, vector<1x32xf32>
    %112 = vector.shape_cast %111 : vector<1x32xf32> to vector<32xf32>
    %c0_43 = arith.constant 0 : index
    %c0_44 = arith.constant 0 : index
    %113 = vector.load %arg8[%c0_43, %c0_44] : memref<1x32xf32, #tpu.memory_space<vmem>>, vector<1x32xf32>
    %114 = vector.shape_cast %113 : vector<1x32xf32> to vector<32xf32>
    %cst_45 = arith.constant dense<0.000000e+00> : vector<8xf32>
    %115 = vector.multi_reduction <add>, %110, %cst_45 [1] : vector<8x32xf32> to vector<8xf32>
    %116 = vector.shape_cast %115 : vector<8xf32> to vector<8x1xf32>
    %cst_46 = arith.constant 3.200000e+01 : f32
    %117 = vector.broadcast %cst_46 : f32 to vector<8x1xf32>
    %118 = arith.divf %116, %117 : vector<8x1xf32>
    %119 = vector.broadcast %118 : vector<8x1xf32> to vector<8x32xf32>
    %120 = arith.subf %110, %119 : vector<8x32xf32>
    %121 = arith.mulf %120, %120 : vector<8x32xf32>
    %cst_47 = arith.constant dense<0.000000e+00> : vector<8xf32>
    %122 = vector.multi_reduction <add>, %121, %cst_47 [1] : vector<8x32xf32> to vector<8xf32>
    %123 = vector.shape_cast %122 : vector<8xf32> to vector<8x1xf32>
    %cst_48 = arith.constant 3.200000e+01 : f32
    %124 = vector.broadcast %cst_48 : f32 to vector<8x1xf32>
    %125 = arith.divf %123, %124 : vector<8x1xf32>
    %126 = vector.broadcast %118 : vector<8x1xf32> to vector<8x32xf32>
    %127 = arith.subf %110, %126 : vector<8x32xf32>
    %cst_49 = arith.constant 9.99999974E-6 : f32
    %128 = vector.broadcast %cst_49 : f32 to vector<8x1xf32>
    %129 = arith.addf %125, %128 : vector<8x1xf32>
    %130 = math.rsqrt %129 : vector<8x1xf32>
    %131 = vector.broadcast %130 : vector<8x1xf32> to vector<8x32xf32>
    %132 = arith.mulf %127, %131 : vector<8x32xf32>
    %133 = vector.shape_cast %112 : vector<32xf32> to vector<1x32xf32>
    %134 = vector.broadcast %133 : vector<1x32xf32> to vector<8x32xf32>
    %135 = arith.mulf %132, %134 : vector<8x32xf32>
    %136 = vector.shape_cast %114 : vector<32xf32> to vector<1x32xf32>
    %137 = vector.broadcast %136 : vector<1x32xf32> to vector<8x32xf32>
    %138 = arith.addf %135, %137 : vector<8x32xf32>
    %c0_50 = arith.constant 0 : index
    %c0_51 = arith.constant 0 : index
    %139 = vector.load %arg9[%c0_50, %c0_51] : memref<32x64xf32, #tpu.memory_space<vmem>>, vector<32x64xf32>
    %cst_52 = arith.constant dense<0.000000e+00> : vector<8x64xf32>
    %140 = tpu.matmul %138, %139, %cst_52 {dimension_numbers = #tpu.dot_dimension_numbers<[1], [0], [0], [1], [0, 0, 1, 1], [], []>} : vector<8x32xf32>, vector<32x64xf32>, vector<8x64xf32> -> vector<8x64xf32>
    %c0_53 = arith.constant 0 : index
    %c0_54 = arith.constant 0 : index
    %141 = vector.load %arg10[%c0_53, %c0_54] : memref<1x64xf32, #tpu.memory_space<vmem>>, vector<1x64xf32>
    %142 = vector.shape_cast %141 : vector<1x64xf32> to vector<64xf32>
    %143 = vector.shape_cast %142 : vector<64xf32> to vector<1x64xf32>
    %144 = vector.broadcast %143 : vector<1x64xf32> to vector<8x64xf32>
    %145 = arith.addf %140, %144 : vector<8x64xf32>
    %146 = math.tanh %145 : vector<8x64xf32>
    %c0_55 = arith.constant 0 : index
    %c0_56 = arith.constant 0 : index
    %147 = vector.load %arg11[%c0_55, %c0_56] : memref<64x32xf32, #tpu.memory_space<vmem>>, vector<64x32xf32>
    %cst_57 = arith.constant dense<0.000000e+00> : vector<8x32xf32>
    %148 = tpu.matmul %146, %147, %cst_57 {dimension_numbers = #tpu.dot_dimension_numbers<[1], [0], [0], [1], [0, 0, 1, 1], [], []>} : vector<8x64xf32>, vector<64x32xf32>, vector<8x32xf32> -> vector<8x32xf32>
    %149 = arith.addf %110, %148 : vector<8x32xf32>
    %c0_58 = arith.constant 0 : index
    %c0_59 = arith.constant 0 : index
    %150 = vector.load %arg12[%c0_58, %c0_59] : memref<1x32xf32, #tpu.memory_space<vmem>>, vector<1x32xf32>
    %151 = vector.shape_cast %150 : vector<1x32xf32> to vector<32xf32>
    %152 = vector.shape_cast %151 : vector<32xf32> to vector<1x32xf32>
    %153 = vector.broadcast %152 : vector<1x32xf32> to vector<8x32xf32>
    %154 = arith.addf %149, %153 : vector<8x32xf32>
    %c0_60 = arith.constant 0 : index
    %c0_61 = arith.constant 0 : index
    %c0_62 = arith.constant 0 : index
    %155 = vector.load %arg15[%c0_60, %c0_61, %c0_62] : memref<1x8x32xf32, #tpu.memory_space<vmem>>, vector<1x8x32xf32>
    %156 = vector.shape_cast %155 : vector<1x8x32xf32> to vector<8x32xf32>
    %157 = vector.shape_cast %154 : vector<8x32xf32> to vector<1x8x32xf32>
    tpu.vector_store %arg15[%c0_60, %c0_61, %c0_62], %157 {strides = array<i32>} : memref<1x8x32xf32, #tpu.memory_space<vmem>>, vector<1x8x32xf32>,
    return
  }
  func.func @transform_0(%arg0: i32) -> (i32, i32, i32) {
    %c0_i32 = arith.constant 0 : i32
    %c0_i32_0 = arith.constant 0 : i32
    %c0_i32_1 = arith.constant 0 : i32
    return %arg0, %c0_i32, %c0_i32_0 : i32, i32, i32
  }
  func.func @transform_1(%arg0: i32) -> (i32, i32) {
    %c0_i32 = arith.constant 0 : i32
    %c0_i32_0 = arith.constant 0 : i32
    %c0_i32_1 = arith.constant 0 : i32
    return %c0_i32, %c0_i32_0 : i32, i32
  }
  func.func @transform_2(%arg0: i32) -> (i32, i32) {
    %c0_i32 = arith.constant 0 : i32
    %c0_i32_0 = arith.constant 0 : i32
    %c0_i32_1 = arith.constant 0 : i32
    return %c0_i32, %c0_i32_0 : i32, i32
  }
  func.func @transform_3(%arg0: i32) -> (i32, i32) {
    %c0_i32 = arith.constant 0 : i32
    %c0_i32_0 = arith.constant 0 : i32
    %c0_i32_1 = arith.constant 0 : i32
    return %c0_i32, %c0_i32_0 : i32, i32
  }
  func.func @transform_4(%arg0: i32) -> (i32, i32) {
    %c0_i32 = arith.constant 0 : i32
    %c0_i32_0 = arith.constant 0 : i32
    %c0_i32_1 = arith.constant 0 : i32
    return %c0_i32, %c0_i32_0 : i32, i32
  }
  func.func @transform_5(%arg0: i32) -> (i32, i32) {
    %c0_i32 = arith.constant 0 : i32
    %c0_i32_0 = arith.constant 0 : i32
    %c0_i32_1 = arith.constant 0 : i32
    return %c0_i32, %c0_i32_0 : i32, i32
  }
  func.func @transform_6(%arg0: i32) -> (i32, i32) {
    %c0_i32 = arith.constant 0 : i32
    %c0_i32_0 = arith.constant 0 : i32
    %c0_i32_1 = arith.constant 0 : i32
    return %c0_i32, %c0_i32_0 : i32, i32
  }
  func.func @transform_7(%arg0: i32) -> (i32, i32) {
    %c0_i32 = arith.constant 0 : i32
    %c0_i32_0 = arith.constant 0 : i32
    %c0_i32_1 = arith.constant 0 : i32
    return %c0_i32, %c0_i32_0 : i32, i32
  }
  func.func @transform_8(%arg0: i32) -> (i32, i32) {
    %c0_i32 = arith.constant 0 : i32
    %c0_i32_0 = arith.constant 0 : i32
    %c0_i32_1 = arith.constant 0 : i32
    return %c0_i32, %c0_i32_0 : i32, i32
  }
  func.func @transform_9(%arg0: i32) -> (i32, i32) {
    %c0_i32 = arith.constant 0 : i32
    %c0_i32_0 = arith.constant 0 : i32
    %c0_i32_1 = arith.constant 0 : i32
    return %c0_i32, %c0_i32_0 : i32, i32
  }
  func.func @transform_10(%arg0: i32) -> (i32, i32) {
    %c0_i32 = arith.constant 0 : i32
    %c0_i32_0 = arith.constant 0 : i32
    %c0_i32_1 = arith.constant 0 : i32
    return %c0_i32, %c0_i32_0 : i32, i32
  }
  func.func @transform_11(%arg0: i32) -> (i32, i32) {
    %c0_i32 = arith.constant 0 : i32
    %c0_i32_0 = arith.constant 0 : i32
    %c0_i32_1 = arith.constant 0 : i32
    return %c0_i32, %c0_i32_0 : i32, i32
  }
  func.func @transform_12(%arg0: i32) -> (i32, i32) {
    %c0_i32 = arith.constant 0 : i32
    %c0_i32_0 = arith.constant 0 : i32
    %c0_i32_1 = arith.constant 0 : i32
    return %c0_i32, %c0_i32_0 : i32, i32
  }
  func.func @transform_13(%arg0: i32) -> (i32, i32) {
    %c0_i32 = arith.constant 0 : i32
    %c0_i32_0 = arith.constant 0 : i32
    %c0_i32_1 = arith.constant 0 : i32
    return %c0_i32, %c0_i32_0 : i32, i32
  }
  func.func @transform_14(%arg0: i32) -> (i32, i32, i32) {
    %c0_i32 = arith.constant 0 : i32
    %c0_i32_0 = arith.constant 0 : i32
    %c0_i32_1 = arith.constant 0 : i32
    return %arg0, %c0_i32, %c0_i32_0 : i32, i32, i32
  }
}

</mosaic_0001>

<llo_original>
// kernel: tpu_custom_call.1
$region0: #{tpu_custom_call.1}
  #allocation0 [shape = 'u32[]', space=smem, size = 0x4, offset = 0x4, fixed_abs, tag = 'smem constant byte address 0x4 - core index']
  #allocation1 [shape = 'u32[72,128]{1,0:T(1,128)}', space=vmem, size = 0x9000, scoped, tag = 'internal scratch']
  %s0 = inlined_call_operand.hbm [shape: f32[2,8,32], index: 0, kind: input, shape index: {}]
  %s1 = inlined_call_operand.hbm [shape: f32[1,32], index: 1, kind: input, shape index: {}]
  %s2 = inlined_call_operand.vmem [shape: f32[1,32], index: 2, kind: input, shape index: {}]
  %s3 = inlined_call_operand.vmem [shape: f32[32,96], index: 3, kind: input, shape index: {}]
  %s4 = inlined_call_operand.vmem [shape: f32[32,32], index: 4, kind: input, shape index: {}]
  %s5 = inlined_call_operand.vmem [shape: f32[1,32], index: 5, kind: input, shape index: {}]
  %s6 = inlined_call_operand.vmem [shape: f32[1,32], index: 6, kind: input, shape index: {}]
  %s7 = inlined_call_operand.vmem [shape: f32[1,32], index: 7, kind: input, shape index: {}]
  %s8 = inlined_call_operand.vmem [shape: f32[32,64], index: 8, kind: input, shape index: {}]
  %s9 = inlined_call_operand.vmem [shape: f32[1,64], index: 9, kind: input, shape index: {}]
  %s10 = inlined_call_operand.vmem [shape: f32[64,32], index: 10, kind: input, shape index: {}]
  %s11 = inlined_call_operand.vmem [shape: f32[1,32], index: 11, kind: input, shape index: {}]
  %s12 = inlined_call_operand.vmem [shape: f32[1,32], index: 12, kind: input, shape index: {}]
  %s13 = inlined_call_operand.vmem [shape: f32[1,32], index: 13, kind: input, shape index: {}]
  %s14 = inlined_call_operand.hbm [shape: f32[2,8,32], index: 14, kind: output, shape index: {}]
  %s15 = sld [smem:[#allocation0]]
  $region97: #{tpu_custom_call.1} parent=0
    _
  %s17 = ssub.s32 1, %s15
  %s18 = scalar_select 0, %s17, %s15
  $region1: #{tpu_custom_call.1} parent=0
    #allocation2 [shape = 'u8[8192]{0}', space=vmem, size = 0x2000, scoped, tag = 'input window, operand 0']
    #allocation3 [shape = 's32[2]{0}', space=sflag, size = 0x8, scoped, tag = 'scoped memory for tpu_custom_call.1']
    #allocation4 [shape = 's32[2]{0}', space=sflag, size = 0x8, scoped, tag = 'scoped memory for tpu_custom_call.1']
    #allocation5 [shape = 'u8[512]{0}', space=vmem, size = 0x400, scoped, tag = 'input window, operand 1, single buffered']
    #allocation6 [shape = 's32[1]{0}', space=sflag, size = 0x4, scoped, tag = 'scoped memory for tpu_custom_call.1']
    #allocation7 [shape = 'u8[8192]{0}', space=vmem, size = 0x2000, scoped, tag = 'output window, operand 0']
    %19 = vsyncpa [#allocation3], 0
    %s20 = scalar_lea.sflag [#allocation3], 1
    %21 = vsyncpa %s20, 0
    %22 = vsyncpa [#allocation6], 0
    %23 = vsyncpa [#allocation4], 0
    %s24 = scalar_lea.sflag [#allocation4], 1
    %25 = vsyncpa %s24, 0
    loop: start=0, step=1, limit=4
    $region2: #{tpu_custom_call.1} parent=1 // loop_pre_header
      _
    $region3: #{tpu_custom_call.1} parent=1 // loop_header
      %s27 = sphi 0, %s31
      %p28 = scmp.ge.s32.totalorder %s27, 4
      %s37 = sphi 0, %s39
      %s40 = sphi 0, %s37
      %s41 = sphi 0, %s40
      %s57 = sphi 0, %s41
      %s61 = sphi 0, %s61
      %s63 = sphi 0, %s61
      %s64 = sphi 0, %s63
      %s78 = sphi 0, %s64
      %s82 = sphi 0, %s82
      %s84 = sphi 0, %s82
      %s85 = sphi 0, %s84
      %s99 = sphi 0, %s85
      %s103 = sphi 0, %s103
      %s105 = sphi 0, %s103
      %s106 = sphi 0, %s105
      %s120 = sphi 0, %s106
      %s124 = sphi 0, %s124
      %s126 = sphi 0, %s124
      %s127 = sphi 0, %s126
      %s141 = sphi 0, %s127
      %s145 = sphi 0, %s145
      %s147 = sphi 0, %s145
      %s148 = sphi 0, %s147
      %s162 = sphi 0, %s148
      %s166 = sphi 0, %s166
      %s168 = sphi 0, %s166
      %s169 = sphi 0, %s168
      %s183 = sphi 0, %s169
      %s187 = sphi 0, %s187
      %s189 = sphi 0, %s187
      %s190 = sphi 0, %s189
      %s204 = sphi 0, %s190
      %s208 = sphi 0, %s208
      %s210 = sphi 0, %s208
      %s211 = sphi 0, %s210
      %s225 = sphi 0, %s211
      %s229 = sphi 0, %s229
      %s231 = sphi 0, %s229
      %s232 = sphi 0, %s231
      %s246 = sphi 0, %s232
      %s250 = sphi 0, %s250
      %s252 = sphi 0, %s250
      %s253 = sphi 0, %s252
      %s267 = sphi 0, %s253
      %s271 = sphi 0, %s271
      %s273 = sphi 0, %s271
      %s274 = sphi 0, %s273
      %s288 = sphi 0, %s274
      %s292 = sphi 0, %s292
      %s294 = sphi 0, %s292
      %s295 = sphi 0, %s294
      %s309 = sphi 0, %s295
      %s313 = sphi 0, %s313
      %s315 = sphi 0, %s313
      %s316 = sphi 0, %s315
      %s330 = sphi 0, %s316
      %s336 = sphi 0, %s338
      %s339 = sphi 0, %s336
      %s340 = sphi 0, %s339
      %s356 = sphi 0, %s340
    $region4: #{tpu_custom_call.1} parent=1 // loop_header_branch
      %30 = sbr.rel (%p28) target = $region8
    $region5: #{tpu_custom_call.1} parent=1 // loop_body
      %s32 = ssub.s32 %s27, 1
      %s33 = ssub.s32 %s27, 2
      %s34 = sadd.s32 %s27, 1
      %s35 = ssub.s32 %s27, %s34
      %p36 = scmp.eq.s32.totalorder %s35, 0
      %s38 = sadd.s32 %s37, 1
      %s39 = scalar_select %p36, %s37, %s38
      %p42 = pneg %p36
      %p43 = scmp.eq.s32.totalorder %s27, 1
      %p44 = por %p42, %p43
      %p45 = scmp.ne.s32.totalorder %s37, %s40
      %p46 = scmp.eq.s32.totalorder %s27, 0
      %p47 = por %p45, %p46
      %p48 = scmp.ne.s32.totalorder %s37, %s40
      %p49 = scmp.eq.s32.totalorder %s32, 1
      %p50 = por %p48, %p49
      %p51 = scmp.ne.s32.totalorder %s40, %s41
      %p52 = scmp.eq.s32.totalorder %s32, 0
      %p53 = por %p51, %p52
      %p54 = scmp.ne.s32.totalorder %s40, %s41
      %p55 = scmp.eq.s32.totalorder %s33, 1
      %p56 = por %p54, %p55
      %p58 = scmp.ne.s32.totalorder %s41, %s57
      %p59 = scmp.eq.s32.totalorder %s33, 0
      %p60 = por %p58, %p59
      %s62 = sadd.s32 %s61, 1
      %p65 = scmp.eq.s32.totalorder %s27, 1
      %p66 = scmp.ne.s32.totalorder %s61, %s63
      %p67 = scmp.eq.s32.totalorder %s27, 0
      %p68 = por %p66, %p67
      %p69 = scmp.ne.s32.totalorder %s61, %s63
      %p70 = scmp.eq.s32.totalorder %s32, 1
      %p71 = por %p69, %p70
      %p72 = scmp.ne.s32.totalorder %s63, %s64
      %p73 = scmp.eq.s32.totalorder %s32, 0
      %p74 = por %p72, %p73
      %p75 = scmp.ne.s32.totalorder %s63, %s64
      %p76 = scmp.eq.s32.totalorder %s33, 1
      %p77 = por %p75, %p76
      %p79 = scmp.ne.s32.totalorder %s64, %s78
      %p80 = scmp.eq.s32.totalorder %s33, 0
      %p81 = por %p79, %p80
      %s83 = sadd.s32 %s82, 1
      %p86 = scmp.eq.s32.totalorder %s27, 1
      %p87 = scmp.ne.s32.totalorder %s82, %s84
      %p88 = scmp.eq.s32.totalorder %s27, 0
      %p89 = por %p87, %p88
      %p90 = scmp.ne.s32.totalorder %s82, %s84
      %p91 = scmp.eq.s32.totalorder %s32, 1
      %p92 = por %p90, %p91
      %p93 = scmp.ne.s32.totalorder %s84, %s85
      %p94 = scmp.eq.s32.totalorder %s32, 0
      %p95 = por %p93, %p94
      %p96 = scmp.ne.s32.totalorder %s84, %s85
      %p97 = scmp.eq.s32.totalorder %s33, 1
      %p98 = por %p96, %p97
      %p100 = scmp.ne.s32.totalorder %s85, %s99
      %p101 = scmp.eq.s32.totalorder %s33, 0
      %p102 = por %p100, %p101
      %s104 = sadd.s32 %s103, 1
      %p107 = scmp.eq.s32.totalorder %s27, 1
      %p108 = scmp.ne.s32.totalorder %s103, %s105
      %p109 = scmp.eq.s32.totalorder %s27, 0
      %p110 = por %p108, %p109
      %p111 = scmp.ne.s32.totalorder %s103, %s105
      %p112 = scmp.eq.s32.totalorder %s32, 1
      %p113 = por %p111, %p112
      %p114 = scmp.ne.s32.totalorder %s105, %s106
      %p115 = scmp.eq.s32.totalorder %s32, 0
      %p116 = por %p114, %p115
      %p117 = scmp.ne.s32.totalorder %s105, %s106
      %p118 = scmp.eq.s32.totalorder %s33, 1
      %p119 = por %p117, %p118
      %p121 = scmp.ne.s32.totalorder %s106, %s120
      %p122 = scmp.eq.s32.totalorder %s33, 0
      %p123 = por %p121, %p122
      %s125 = sadd.s32 %s124, 1
      %p128 = scmp.eq.s32.totalorder %s27, 1
      %p129 = scmp.ne.s32.totalorder %s124, %s126
      %p130 = scmp.eq.s32.totalorder %s27, 0
      %p131 = por %p129, %p130
      %p132 = scmp.ne.s32.totalorder %s124, %s126
      %p133 = scmp.eq.s32.totalorder %s32, 1
      %p134 = por %p132, %p133
      %p135 = scmp.ne.s32.totalorder %s126, %s127
      %p136 = scmp.eq.s32.totalorder %s32, 0
      %p137 = por %p135, %p136
      %p138 = scmp.ne.s32.totalorder %s126, %s127
      %p139 = scmp.eq.s32.totalorder %s33, 1
      %p140 = por %p138, %p139
      %p142 = scmp.ne.s32.totalorder %s127, %s141
      %p143 = scmp.eq.s32.totalorder %s33, 0
      %p144 = por %p142, %p143
      %s146 = sadd.s32 %s145, 1
      %p149 = scmp.eq.s32.totalorder %s27, 1
      %p150 = scmp.ne.s32.totalorder %s145, %s147
      %p151 = scmp.eq.s32.totalorder %s27, 0
      %p152 = por %p150, %p151
      %p153 = scmp.ne.s32.totalorder %s145, %s147
      %p154 = scmp.eq.s32.totalorder %s32, 1
      %p155 = por %p153, %p154
      %p156 = scmp.ne.s32.totalorder %s147, %s148
      %p157 = scmp.eq.s32.totalorder %s32, 0
      %p158 = por %p156, %p157
      %p159 = scmp.ne.s32.totalorder %s147, %s148
      %p160 = scmp.eq.s32.totalorder %s33, 1
      %p161 = por %p159, %p160
      %p163 = scmp.ne.s32.totalorder %s148, %s162
      %p164 = scmp.eq.s32.totalorder %s33, 0
      %p165 = por %p163, %p164
      %s167 = sadd.s32 %s166, 1
      %p170 = scmp.eq.s32.totalorder %s27, 1
      %p171 = scmp.ne.s32.totalorder %s166, %s168
      %p172 = scmp.eq.s32.totalorder %s27, 0
      %p173 = por %p171, %p172
      %p174 = scmp.ne.s32.totalorder %s166, %s168
      %p175 = scmp.eq.s32.totalorder %s32, 1
      %p176 = por %p174, %p175
      %p177 = scmp.ne.s32.totalorder %s168, %s169
      %p178 = scmp.eq.s32.totalorder %s32, 0
      %p179 = por %p177, %p178
      %p180 = scmp.ne.s32.totalorder %s168, %s169
      %p181 = scmp.eq.s32.totalorder %s33, 1
      %p182 = por %p180, %p181
      %p184 = scmp.ne.s32.totalorder %s169, %s183
      %p185 = scmp.eq.s32.totalorder %s33, 0
      %p186 = por %p184, %p185
      %s188 = sadd.s32 %s187, 1
      %p191 = scmp.eq.s32.totalorder %s27, 1
      %p192 = scmp.ne.s32.totalorder %s187, %s189
      %p193 = scmp.eq.s32.totalorder %s27, 0
      %p194 = por %p192, %p193
      %p195 = scmp.ne.s32.totalorder %s187, %s189
      %p196 = scmp.eq.s32.totalorder %s32, 1
      %p197 = por %p195, %p196
      %p198 = scmp.ne.s32.totalorder %s189, %s190
      %p199 = scmp.eq.s32.totalorder %s32, 0
      %p200 = por %p198, %p199
      %p201 = scmp.ne.s32.totalorder %s189, %s190
      %p202 = scmp.eq.s32.totalorder %s33, 1
      %p203 = por %p201, %p202
      %p205 = scmp.ne.s32.totalorder %s190, %s204
      %p206 = scmp.eq.s32.totalorder %s33, 0
      %p207 = por %p205, %p206
      %s209 = sadd.s32 %s208, 1
      %p212 = scmp.eq.s32.totalorder %s27, 1
      %p213 = scmp.ne.s32.totalorder %s208, %s210
      %p214 = scmp.eq.s32.totalorder %s27, 0
      %p215 = por %p213, %p214
      %p216 = scmp.ne.s32.totalorder %s208, %s210
      %p217 = scmp.eq.s32.totalorder %s32, 1
      %p218 = por %p216, %p217
      %p219 = scmp.ne.s32.totalorder %s210, %s211
      %p220 = scmp.eq.s32.totalorder %s32, 0
      %p221 = por %p219, %p220
      %p222 = scmp.ne.s32.totalorder %s210, %s211
      %p223 = scmp.eq.s32.totalorder %s33, 1
      %p224 = por %p222, %p223
      %p226 = scmp.ne.s32.totalorder %s211, %s225
      %p227 = scmp.eq.s32.totalorder %s33, 0
      %p228 = por %p226, %p227
      %s230 = sadd.s32 %s229, 1
      %p233 = scmp.eq.s32.totalorder %s27, 1
      %p234 = scmp.ne.s32.totalorder %s229, %s231
      %p235 = scmp.eq.s32.totalorder %s27, 0
      %p236 = por %p234, %p235
      %p237 = scmp.ne.s32.totalorder %s229, %s231
      %p238 = scmp.eq.s32.totalorder %s32, 1
      %p239 = por %p237, %p238
      %p240 = scmp.ne.s32.totalorder %s231, %s232
      %p241 = scmp.eq.s32.totalorder %s32, 0
      %p242 = por %p240, %p241
      %p243 = scmp.ne.s32.totalorder %s231, %s232
      %p244 = scmp.eq.s32.totalorder %s33, 1
      %p245 = por %p243, %p244
      %p247 = scmp.ne.s32.totalorder %s232, %s246
      %p248 = scmp.eq.s32.totalorder %s33, 0
      %p249 = por %p247, %p248
      %s251 = sadd.s32 %s250, 1
      %p254 = scmp.eq.s32.totalorder %s27, 1
      %p255 = scmp.ne.s32.totalorder %s250, %s252
      %p256 = scmp.eq.s32.totalorder %s27, 0
      %p257 = por %p255, %p256
      %p258 = scmp.ne.s32.totalorder %s250, %s252
      %p259 = scmp.eq.s32.totalorder %s32, 1
      %p260 = por %p258, %p259
      %p261 = scmp.ne.s32.totalorder %s252, %s253
      %p262 = scmp.eq.s32.totalorder %s32, 0
      %p263 = por %p261, %p262
      %p264 = scmp.ne.s32.totalorder %s252, %s253
      %p265 = scmp.eq.s32.totalorder %s33, 1
      %p266 = por %p264, %p265
      %p268 = scmp.ne.s32.totalorder %s253, %s267
      %p269 = scmp.eq.s32.totalorder %s33, 0
      %p270 = por %p268, %p269
      %s272 = sadd.s32 %s271, 1
      %p275 = scmp.eq.s32.totalorder %s27, 1
      %p276 = scmp.ne.s32.totalorder %s271, %s273
      %p277 = scmp.eq.s32.totalorder %s27, 0
      %p278 = por %p276, %p277
      %p279 = scmp.ne.s32.totalorder %s271, %s273
      %p280 = scmp.eq.s32.totalorder %s32, 1
      %p281 = por %p279, %p280
      %p282 = scmp.ne.s32.totalorder %s273, %s274
      %p283 = scmp.eq.s32.totalorder %s32, 0
      %p284 = por %p282, %p283
      %p285 = scmp.ne.s32.totalorder %s273, %s274
      %p286 = scmp.eq.s32.totalorder %s33, 1
      %p287 = por %p285, %p286
      %p289 = scmp.ne.s32.totalorder %s274, %s288
      %p290 = scmp.eq.s32.totalorder %s33, 0
      %p291 = por %p289, %p290
      %s293 = sadd.s32 %s292, 1
      %p296 = scmp.eq.s32.totalorder %s27, 1
      %p297 = scmp.ne.s32.totalorder %s292, %s294
      %p298 = scmp.eq.s32.totalorder %s27, 0
      %p299 = por %p297, %p298
      %p300 = scmp.ne.s32.totalorder %s292, %s294
      %p301 = scmp.eq.s32.totalorder %s32, 1
      %p302 = por %p300, %p301
      %p303 = scmp.ne.s32.totalorder %s294, %s295
      %p304 = scmp.eq.s32.totalorder %s32, 0
      %p305 = por %p303, %p304
      %p306 = scmp.ne.s32.totalorder %s294, %s295
      %p307 = scmp.eq.s32.totalorder %s33, 1
      %p308 = por %p306, %p307
      %p310 = scmp.ne.s32.totalorder %s295, %s309
      %p311 = scmp.eq.s32.totalorder %s33, 0
      %p312 = por %p310, %p311
      %s314 = sadd.s32 %s313, 1
      %p317 = scmp.eq.s32.totalorder %s27, 1
      %p318 = scmp.ne.s32.totalorder %s313, %s315
      %p319 = scmp.eq.s32.totalorder %s27, 0
      %p320 = por %p318, %p319
      %p321 = scmp.ne.s32.totalorder %s313, %s315
      %p322 = scmp.eq.s32.totalorder %s32, 1
      %p323 = por %p321, %p322
      %p324 = scmp.ne.s32.totalorder %s315, %s316
      %p325 = scmp.eq.s32.totalorder %s32, 0
      %p326 = por %p324, %p325
      %p327 = scmp.ne.s32.totalorder %s315, %s316
      %p328 = scmp.eq.s32.totalorder %s33, 1
      %p329 = por %p327, %p328
      %p331 = scmp.ne.s32.totalorder %s316, %s330
      %p332 = scmp.eq.s32.totalorder %s33, 0
      %p333 = por %p331, %p332
      %s334 = ssub.s32 %s27, %s34
      %p335 = scmp.eq.s32.totalorder %s334, 0
      %s337 = sadd.s32 %s336, 1
      %s338 = scalar_select %p335, %s336, %s337
      %p341 = pneg %p335
      %p342 = scmp.eq.s32.totalorder %s27, 1
      %p343 = por %p341, %p342
      %p344 = scmp.ne.s32.totalorder %s336, %s339
      %p345 = scmp.eq.s32.totalorder %s27, 0
      %p346 = por %p344, %p345
      %p347 = scmp.ne.s32.totalorder %s336, %s339
      %p348 = scmp.eq.s32.totalorder %s32, 1
      %p349 = por %p347, %p348
      %p350 = scmp.ne.s32.totalorder %s339, %s340
      %p351 = scmp.eq.s32.totalorder %s32, 0
      %p352 = por %p350, %p351
      %p353 = scmp.ne.s32.totalorder %s339, %s340
      %p354 = scmp.eq.s32.totalorder %s33, 1
      %p355 = por %p353, %p354
      %p357 = scmp.ne.s32.totalorder %s340, %s356
      %p358 = scmp.eq.s32.totalorder %s33, 0
      %p359 = por %p357, %p358
      %p360 = scmp.le.s32.totalorder 1, %s27
      %p361 = scmp.lt.s32.totalorder %s27, 3
      %p362 = pnand %p360, %p361
      %p363 = pneg %p362
      // Predicated region
      $region9: #{tpu_custom_call.1} parent=5 // pred_check
        _
      $region10: #{tpu_custom_call.1} parent=5 // pred_check_branch
        %365 = sbr.rel (%p362) target = $region12
      $region11: #{tpu_custom_call.1} parent=5 // pred_region
        %s366 = ssub.s32 %s27, 1
        // Predicated region
        $region13: #{tpu_custom_call.1} parent=11 // pred_check
          %p367 = pneg %p74
        $region14: #{tpu_custom_call.1} parent=11 // pred_check_branch
          %369 = sbr.rel (%p367) target = $region16
        $region15: #{tpu_custom_call.1} parent=11 // pred_region
          %371 = vsyncadd [#allocation6], 0
          %s373 = sshll.u32 %s1, 4
          %s374 = int_to_ptr.hbm [resolvable:$true] %s373
          %s375 = sshll.u32 [#allocation5], 4
          %s376 = int_to_ptr.vmem [resolvable:$true] %s375
          %378 = dma.hbm_to_vmem [thread:$0]  %s374, 16, %s376, [#allocation6]
        $region16: #{tpu_custom_call.1} parent=11 // pred_fallthru
          _
        // Predicated region
        $region17: #{tpu_custom_call.1} parent=11 // pred_check
          %p379 = pneg %p95
        $region18: #{tpu_custom_call.1} parent=11 // pred_check_branch
          %381 = sbr.rel (%p379) target = $region20
        $region19: #{tpu_custom_call.1} parent=11 // pred_region
          _
        $region20: #{tpu_custom_call.1} parent=11 // pred_fallthru
          _
        // Predicated region
        $region21: #{tpu_custom_call.1} parent=11 // pred_check
          %p382 = pneg %p116
        $region22: #{tpu_custom_call.1} parent=11 // pred_check_branch
          %384 = sbr.rel (%p382) target = $region24
        $region23: #{tpu_custom_call.1} parent=11 // pred_region
          _
        $region24: #{tpu_custom_call.1} parent=11 // pred_fallthru
          _
        // Predicated region
        $region25: #{tpu_custom_call.1} parent=11 // pred_check
          %p385 = pneg %p137
        $region26: #{tpu_custom_call.1} parent=11 // pred_check_branch
          %387 = sbr.rel (%p385) target = $region28
        $region27: #{tpu_custom_call.1} parent=11 // pred_region
          _
        $region28: #{tpu_custom_call.1} parent=11 // pred_fallthru
          _
        // Predicated region
        $region29: #{tpu_custom_call.1} parent=11 // pred_check
          %p388 = pneg %p158
        $region30: #{tpu_custom_call.1} parent=11 // pred_check_branch
          %390 = sbr.rel (%p388) target = $region32
        $region31: #{tpu_custom_call.1} parent=11 // pred_region
          _
        $region32: #{tpu_custom_call.1} parent=11 // pred_fallthru
          _
        // Predicated region
        $region33: #{tpu_custom_call.1} parent=11 // pred_check
          %p391 = pneg %p179
        $region34: #{tpu_custom_call.1} parent=11 // pred_check_branch
          %393 = sbr.rel (%p391) target = $region36
        $region35: #{tpu_custom_call.1} parent=11 // pred_region
          _
        $region36: #{tpu_custom_call.1} parent=11 // pred_fallthru
          _
        // Predicated region
        $region37: #{tpu_custom_call.1} parent=11 // pred_check
          %p394 = pneg %p200
        $region38: #{tpu_custom_call.1} parent=11 // pred_check_branch
          %396 = sbr.rel (%p394) target = $region40
        $region39: #{tpu_custom_call.1} parent=11 // pred_region
          _
        $region40: #{tpu_custom_call.1} parent=11 // pred_fallthru
          _
        // Predicated region
        $region41: #{tpu_custom_call.1} parent=11 // pred_check
          %p397 = pneg %p221
        $region42: #{tpu_custom_call.1} parent=11 // pred_check_branch
          %399 = sbr.rel (%p397) target = $region44
        $region43: #{tpu_custom_call.1} parent=11 // pred_region
          _
        $region44: #{tpu_custom_call.1} parent=11 // pred_fallthru
          _
        // Predicated region
        $region45: #{tpu_custom_call.1} parent=11 // pred_check
          %p400 = pneg %p242
        $region46: #{tpu_custom_call.1} parent=11 // pred_check_branch
          %402 = sbr.rel (%p400) target = $region48
        $region47: #{tpu_custom_call.1} parent=11 // pred_region
          _
        $region48: #{tpu_custom_call.1} parent=11 // pred_fallthru
          _
        // Predicated region
        $region49: #{tpu_custom_call.1} parent=11 // pred_check
          %p403 = pneg %p263
        $region50: #{tpu_custom_call.1} parent=11 // pred_check_branch
          %405 = sbr.rel (%p403) target = $region52
        $region51: #{tpu_custom_call.1} parent=11 // pred_region
          _
        $region52: #{tpu_custom_call.1} parent=11 // pred_fallthru
          _
        // Predicated region
        $region53: #{tpu_custom_call.1} parent=11 // pred_check
          %p406 = pneg %p284
        $region54: #{tpu_custom_call.1} parent=11 // pred_check_branch
          %408 = sbr.rel (%p406) target = $region56
        $region55: #{tpu_custom_call.1} parent=11 // pred_region
          _
        $region56: #{tpu_custom_call.1} parent=11 // pred_fallthru
          _
        // Predicated region
        $region57: #{tpu_custom_call.1} parent=11 // pred_check
          %p409 = pneg %p305
        $region58: #{tpu_custom_call.1} parent=11 // pred_check_branch
          %411 = sbr.rel (%p409) target = $region60
        $region59: #{tpu_custom_call.1} parent=11 // pred_region
          _
        $region60: #{tpu_custom_call.1} parent=11 // pred_fallthru
          _
        // Predicated region
        $region61: #{tpu_custom_call.1} parent=11 // pred_check
          %p412 = pneg %p326
        $region62: #{tpu_custom_call.1} parent=11 // pred_check_branch
          %414 = sbr.rel (%p412) target = $region64
        $region63: #{tpu_custom_call.1} parent=11 // pred_region
          _
        $region64: #{tpu_custom_call.1} parent=11 // pred_fallthru
          _
      $region12: #{tpu_custom_call.1} parent=5 // pred_fallthru
        _
      %p415 = scmp.lt.s32.totalorder %s27, 2
      // Predicated region
      $region65: #{tpu_custom_call.1} parent=5 // pred_check
        %p416 = pneg %p415
      $region66: #{tpu_custom_call.1} parent=5 // pred_check_branch
        %418 = sbr.rel (%p416) target = $region68
      $region67: #{tpu_custom_call.1} parent=5 // pred_region
        // Predicated region
        $region69: #{tpu_custom_call.1} parent=67 // pred_check
          %p419 = pneg %p47
        $region70: #{tpu_custom_call.1} parent=67 // pred_check_branch
          %421 = sbr.rel (%p419) target = $region72
        $region71: #{tpu_custom_call.1} parent=67 // pred_region
          %s422 = sand.u32 %s37, 1
          %s423 = scalar_lea.sflag [#allocation3], %s422
          %s424 = sand.u32 %s37, 1
          %s425 = smul.addr %s424, 8
          %s426 = scalar_lea.vmem [#allocation2], %s425
          %428 = vsyncadd %s423, 0
          %s429 = smul.addr %s27, 8
          %s430 = scalar_lea.hbm %s0, %s429
          %s432 = sshll.u32 %s430, 4
          %s433 = int_to_ptr.hbm [resolvable:$true] %s432
          %s434 = sshll.u32 %s426, 4
          %s435 = int_to_ptr.vmem [resolvable:$true] %s434
          %437 = dma.hbm_to_vmem [thread:$0]  %s433, 128, %s435, %s423
        $region72: #{tpu_custom_call.1} parent=67 // pred_fallthru
          _
      $region68: #{tpu_custom_call.1} parent=5 // pred_fallthru
        _
      %p438 = scmp.le.s32.totalorder 1, %s27
      %p439 = scmp.lt.s32.totalorder %s27, 3
      %p440 = pnand %p438, %p439
      %p441 = pneg %p440
      // Predicated region
      $region73: #{tpu_custom_call.1} parent=5 // pred_check
        _
      $region74: #{tpu_custom_call.1} parent=5 // pred_check_branch
        %443 = sbr.rel (%p440) target = $region76
      $region75: #{tpu_custom_call.1} parent=5 // pred_region
        %s444 = ssub.s32 %s27, 1
        %s445 = sand.u32 %s40, 1
        %s446 = scalar_lea.sflag [#allocation3], %s445
        %s447 = sand.u32 %s40, 1
        %s448 = smul.addr %s447, 8
        %s449 = scalar_lea.vmem [#allocation2], %s448
        // Predicated region
        $region77: #{tpu_custom_call.1} parent=75 // pred_check
          %p450 = pneg %p53
        $region78: #{tpu_custom_call.1} parent=75 // pred_check_branch
          %452 = sbr.rel (%p450) target = $region80
        $region79: #{tpu_custom_call.1} parent=75 // pred_region
          %454 = dma.done %s446, 128
        $region80: #{tpu_custom_call.1} parent=75 // pred_fallthru
          _
        // Predicated region
        $region81: #{tpu_custom_call.1} parent=75 // pred_check
          %p455 = pneg %p74
        $region82: #{tpu_custom_call.1} parent=75 // pred_check_branch
          %457 = sbr.rel (%p455) target = $region84
        $region83: #{tpu_custom_call.1} parent=75 // pred_region
          %459 = dma.done [#allocation6], 16
        $region84: #{tpu_custom_call.1} parent=75 // pred_fallthru
          _
        %s460 = sand.u32 %s40, 1
        %s461 = scalar_lea.sflag [#allocation3], %s460
        %s462 = sand.u32 %s40, 1
        %s463 = smul.addr %s462, 8
        %s464 = scalar_lea.vmem [#allocation2], %s463
        %p465 = pneg %p53
        %p466 = pneg %p50
        %p467 = pneg %p74
        %p468 = pneg %p71
        %p469 = pneg %p95
        %p470 = pneg %p92
        %p471 = pneg %p116
        %p472 = pneg %p113
        %p473 = pneg %p137
        %p474 = pneg %p134
        %p475 = pneg %p158
        %p476 = pneg %p155
        %p477 = pneg %p179
        %p478 = pneg %p176
        %p479 = pneg %p200
        %p480 = pneg %p197
        %p481 = pneg %p221
        %p482 = pneg %p218
        %p483 = pneg %p242
        %p484 = pneg %p239
        %p485 = pneg %p263
        %p486 = pneg %p260
        %p487 = pneg %p284
        %p488 = pneg %p281
        %p489 = pneg %p305
        %p490 = pneg %p302
        %p491 = pneg %p326
        %p492 = pneg %p323
        %p493 = pneg %p352
        %p494 = pneg %p349
        %s495 = sand.u32 %s339, 1
        %s496 = scalar_lea.sflag [#allocation4], %s495
        %s497 = sand.u32 %s339, 1
        %s498 = smul.addr %s497, 8
        %s499 = scalar_lea.vmem [#allocation7], %s498
        %v500 = vld [vmem:[%s449] sm:$0xff]
        %v501 = vld [vmem:[#allocation5] sm:$0x1]
        %v502 = vld [vmem:[%s2] sm:$0x1]
        %vm503 = vcmask 261120
        %v504 = vsel %vm503, %v500, 0.0
        %505 = vadd.xlane.f32.xlu0 %v504
        %v506 = vpop.xlane.xlu0 %505
        %v507 = vrcp.pop 32.0
        %v508 = vmul.f32 32.0, %v507
        %v509 = vsub.f32 1.0, %v508
        %v510 = vmul.f32 %v507, %v509
        %v511 = vadd.f32 %v507, %v510
        %vm512 = vweird.f32 %v507
        %v513 = vsel %vm512, %v507, %v511
        %v514 = vmul.f32 %v506, %v513
        %v515 = vsub.f32 %v500, %v514
        %v516 = vmul.f32 %v515, %v515
        %v517 = vsel %vm503, %v516, 0.0
        %518 = vadd.xlane.f32.xlu0 %v517
        %v519 = vpop.xlane.xlu0 %518
        %v520 = vmul.f32 %v519, %v513
        %v521 = vadd.f32 %v520, 1e-05
        %v522 = vrsqrt.pop %v521
        %v523 = vmul.f32 %v522, %v521
        %v524 = vmul.f32 %v523, %v522
        %v525 = vmul.f32 0.5, %v524
        %v526 = vsub.f32 1.5, %v525
        %v527 = vmul.f32 %v522, %v526
        %vm528 = vweird.f32 %v521
        %vm529 = vweird.f32 %v522
        %vm530 = vmor %vm528, %vm529
        %v531 = vsel %vm530, %v522, %v527
        %v532 = vmul.f32 %v515, %v531
        %v534 = vperm.slane %v501, 0
        %v536 = vmul.f32 %v532, %v534
        %v538 = vperm.slane %v502, 0
        %v540 = vadd.f32 %v536, %v538
        %v541 = vld [vmem:[%s3] sm:$0xff]
        %v542 = vld [vmem:[%s3 + $0x8] sm:$0xff]
        %v543 = vld [vmem:[%s3 + $0x10] sm:$0xff]
        %v544 = vld [vmem:[%s3 + $0x18] sm:$0xff]
        %v546 = vsel %vm503, %v540, 0
        %548 = vmatpush.msra.mxu0 0.0
        %549 = vmatpush.msra.mxu0 0.0
        %550 = vmatpush.msra.mxu0 0.0
        %551 = vmatpush.msra.mxu0 0.0
        %552 = vmatpush.msra.mxu0 0.0
        %553 = vmatpush.msra.mxu0 0.0
        %554 = vmatpush.msra.mxu0 0.0
        %555 = vmatpush.msra.mxu0 0.0
        %556 = vmatpush.msra.mxu0 0.0
        %557 = vmatpush.msra.mxu0 0.0
        %558 = vmatpush.msra.mxu0 0.0
        %559 = vmatpush.msra.mxu0 0.0
        %560 = vmatpush.msra.mxu0 %v544
        %561 = vmatpush.msra.mxu0 %v543
        %562 = vmatpush.msra.mxu0 %v542
        %563 = vmatpush.msra.mxu0 %v541
        %564 = vmatmul.f32.gmra.mxu0 %v546
        %v565 = vpop.f32.mrf.mxu0
        %v566 = vadd.f32 0.0, %v565
        %567 = vdwg.mxu0
        %569 = vrot.lane.b32.xlu0 %v566, 96
        %v570 = vpop.permute.xlu0 %569
        %vm571 = vcmask 64512
        %v572 = vsel %vm571, %v566, 0
        %v574 = vsel %vm571, %v570, 0
        %576 = vmatpush.xpose.msra.mxu0 0.0
        %577 = vmatpush.xpose.msra.mxu0 0.0
        %578 = vmatpush.xpose.msra.mxu0 0.0
        %579 = vmatpush.xpose.msra.mxu0 0.0
        %580 = vmatpush.xpose.msra.mxu0 0.0
        %581 = vmatpush.xpose.msra.mxu0 0.0
        %582 = vmatpush.xpose.msra.mxu0 0.0
        %583 = vmatpush.xpose.msra.mxu0 0.0
        %584 = vmatpush.xpose.msra.mxu0 0.0
        %585 = vmatpush.xpose.msra.mxu0 0.0
        %586 = vmatpush.xpose.msra.mxu0 0.0
        %587 = vmatpush.xpose.msra.mxu0 0.0
        %588 = vmatpush.xpose.msra.mxu0 0.0
        %589 = vmatpush.xpose.msra.mxu0 0.0
        %590 = vmatpush.xpose.msra.mxu0 0.0
        %591 = vmatpush.xpose.msra.mxu0 %v574
        %592 = vmatmul.f32.gmra.mxu0 %v572
        %v593 = vpop.f32.mrf.mxu0
        %v594 = vadd.f32 0.0, %v593
        %595 = vdwg.mxu0
        %v596 = vsel %vm571, %v594, -inf
        %597 = vmax.xlane.f32.xlu0 %v596
        %v598 = vpop.xlane.xlu0 %597
        %v599 = vsub.f32 %v594, %v598
        %v600 = vmul.f32 %v599, 1.442695
        %v601 = vpow.pop %v600
        %v602 = vsel %vm571, %v601, 0.0
        %603 = vadd.xlane.f32.xlu0 %v602
        %v604 = vpop.xlane.xlu0 %603
        %v605 = vrcp.pop %v604
        %v606 = vmul.f32 %v601, %v605
        %607 = vrot.lane.b32.xlu0 %v566, 64
        %v608 = vpop.permute.xlu0 %607
        %v611 = vsel %vm571, %v606, 0
        %613 = vmatpush.msra.mxu0 0.0
        %614 = vmatpush.msra.mxu0 0.0
        %615 = vmatpush.msra.mxu0 0.0
        %616 = vmatpush.msra.mxu0 0.0
        %617 = vmatpush.msra.mxu0 0.0
        %618 = vmatpush.msra.mxu0 0.0
        %619 = vmatpush.msra.mxu0 0.0
        %620 = vmatpush.msra.mxu0 0.0
        %621 = vmatpush.msra.mxu0 0.0
        %622 = vmatpush.msra.mxu0 0.0
        %623 = vmatpush.msra.mxu0 0.0
        %624 = vmatpush.msra.mxu0 0.0
        %625 = vmatpush.msra.mxu0 0.0
        %626 = vmatpush.msra.mxu0 0.0
        %627 = vmatpush.msra.mxu0 0.0
        %628 = vmatpush.msra.mxu0 %v608
        %629 = vmatmul.f32.gmra.mxu0 %v611
        %v630 = vpop.f32.mrf.mxu0
        %v631 = vadd.f32 0.0, %v630
        %632 = vdwg.mxu0
        %v633 = vld [vmem:[%s4] sm:$0xff]
        %634 = vrot.lane.b32.xlu0 %v566, 120
        %v635 = vpop.permute.xlu0 %634
        %636 = vrot.lane.b32.xlu0 %v566, 88
        %v637 = vpop.permute.xlu0 %636
        %v638 = vsel %vm571, %v635, 0
        %v640 = vsel %vm571, %v637, 0
        %642 = vmatpush.xpose.msra.mxu0 0.0
        %643 = vmatpush.xpose.msra.mxu0 0.0
        %644 = vmatpush.xpose.msra.mxu0 0.0
        %645 = vmatpush.xpose.msra.mxu0 0.0
        %646 = vmatpush.xpose.msra.mxu0 0.0
        %647 = vmatpush.xpose.msra.mxu0 0.0
        %648 = vmatpush.xpose.msra.mxu0 0.0
        %649 = vmatpush.xpose.msra.mxu0 0.0
        %650 = vmatpush.xpose.msra.mxu0 0.0
        %651 = vmatpush.xpose.msra.mxu0 0.0
        %652 = vmatpush.xpose.msra.mxu0 0.0
        %653 = vmatpush.xpose.msra.mxu0 0.0
        %654 = vmatpush.xpose.msra.mxu0 0.0
        %655 = vmatpush.xpose.msra.mxu0 0.0
        %656 = vmatpush.xpose.msra.mxu0 0.0
        %657 = vmatpush.xpose.msra.mxu0 %v640
        %658 = vmatmul.f32.gmra.mxu0 %v638
        %v659 = vpop.f32.mrf.mxu0
        %v660 = vadd.f32 0.0, %v659
        %661 = vdwg.mxu0
        %v662 = vsel %vm571, %v660, -inf
        %663 = vmax.xlane.f32.xlu0 %v662
        %v664 = vpop.xlane.xlu0 %663
        %v665 = vsub.f32 %v660, %v664
        %v666 = vmul.f32 %v665, 1.442695
        %v667 = vpow.pop %v666
        %v668 = vsel %vm571, %v667, 0.0
        %669 = vadd.xlane.f32.xlu0 %v668
        %v670 = vpop.xlane.xlu0 %669
        %v671 = vrcp.pop %v670
        %v672 = vmul.f32 %v667, %v671
        %673 = vrot.lane.b32.xlu0 %v566, 56
        %v674 = vpop.permute.xlu0 %673
        %v677 = vsel %vm571, %v672, 0
        %679 = vmatpush.msra.mxu0 0.0
        %680 = vmatpush.msra.mxu0 0.0
        %681 = vmatpush.msra.mxu0 0.0
        %682 = vmatpush.msra.mxu0 0.0
        %683 = vmatpush.msra.mxu0 0.0
        %684 = vmatpush.msra.mxu0 0.0
        %685 = vmatpush.msra.mxu0 0.0
        %686 = vmatpush.msra.mxu0 0.0
        %687 = vmatpush.msra.mxu0 0.0
        %688 = vmatpush.msra.mxu0 0.0
        %689 = vmatpush.msra.mxu0 0.0
        %690 = vmatpush.msra.mxu0 0.0
        %691 = vmatpush.msra.mxu0 0.0
        %692 = vmatpush.msra.mxu0 0.0
        %693 = vmatpush.msra.mxu0 0.0
        %694 = vmatpush.msra.mxu0 %v674
        %695 = vmatmul.f32.gmra.mxu0 %v677
        %v696 = vpop.f32.mrf.mxu0
        %v697 = vadd.f32 0.0, %v696
        %698 = vdwg.mxu0
        %v699 = vld [vmem:[%s4 + $0x8] sm:$0xff]
        %v701 = vsel %vm571, %v697, 0
        %703 = vmatpush.msra.mxu0 0.0
        %704 = vmatpush.msra.mxu0 0.0
        %705 = vmatpush.msra.mxu0 0.0
        %706 = vmatpush.msra.mxu0 0.0
        %707 = vmatpush.msra.mxu0 0.0
        %708 = vmatpush.msra.mxu0 0.0
        %709 = vmatpush.msra.mxu0 0.0
        %710 = vmatpush.msra.mxu0 0.0
        %711 = vmatpush.msra.mxu0 0.0
        %712 = vmatpush.msra.mxu0 0.0
        %713 = vmatpush.msra.mxu0 0.0
        %714 = vmatpush.msra.mxu0 0.0
        %715 = vmatpush.msra.mxu0 0.0
        %716 = vmatpush.msra.mxu0 0.0
        %717 = vmatpush.msra.mxu0 0.0
        %718 = vmatpush.msra.mxu0 %v699
        %719 = vmatmul.f32.gmra.mxu0 %v701
        %v720 = vpop.f32.mrf.mxu0
        %v721 = vadd.f32 0.0, %v720
        %722 = vdwg.mxu0
        %v724 = vsel %vm571, %v631, 0
        %726 = vmatpush.msra.mxu0 0.0
        %727 = vmatpush.msra.mxu0 0.0
        %728 = vmatpush.msra.mxu0 0.0
        %729 = vmatpush.msra.mxu0 0.0
        %730 = vmatpush.msra.mxu0 0.0
        %731 = vmatpush.msra.mxu0 0.0
        %732 = vmatpush.msra.mxu0 0.0
        %733 = vmatpush.msra.mxu0 0.0
        %734 = vmatpush.msra.mxu0 0.0
        %735 = vmatpush.msra.mxu0 0.0
        %736 = vmatpush.msra.mxu0 0.0
        %737 = vmatpush.msra.mxu0 0.0
        %738 = vmatpush.msra.mxu0 0.0
        %739 = vmatpush.msra.mxu0 0.0
        %740 = vmatpush.msra.mxu0 0.0
        %741 = vmatpush.msra.mxu0 %v633
        %742 = vmatmul.f32.gmra.mxu0 %v724
        %v743 = vpop.f32.mrf.mxu0
        %v744 = vadd.f32 %v721, %v743
        %745 = vdwg.mxu0
        %746 = vrot.lane.b32.xlu0 %v566, 112
        %v747 = vpop.permute.xlu0 %746
        %748 = vrot.lane.b32.xlu0 %v566, 80
        %v749 = vpop.permute.xlu0 %748
        %v750 = vsel %vm571, %v747, 0
        %v752 = vsel %vm571, %v749, 0
        %754 = vmatpush.xpose.msra.mxu0 0.0
        %755 = vmatpush.xpose.msra.mxu0 0.0
        %756 = vmatpush.xpose.msra.mxu0 0.0
        %757 = vmatpush.xpose.msra.mxu0 0.0
        %758 = vmatpush.xpose.msra.mxu0 0.0
        %759 = vmatpush.xpose.msra.mxu0 0.0
        %760 = vmatpush.xpose.msra.mxu0 0.0
        %761 = vmatpush.xpose.msra.mxu0 0.0
        %762 = vmatpush.xpose.msra.mxu0 0.0
        %763 = vmatpush.xpose.msra.mxu0 0.0
        %764 = vmatpush.xpose.msra.mxu0 0.0
        %765 = vmatpush.xpose.msra.mxu0 0.0
        %766 = vmatpush.xpose.msra.mxu0 0.0
        %767 = vmatpush.xpose.msra.mxu0 0.0
        %768 = vmatpush.xpose.msra.mxu0 0.0
        %769 = vmatpush.xpose.msra.mxu0 %v752
        %770 = vmatmul.f32.gmra.mxu0 %v750
        %v771 = vpop.f32.mrf.mxu0
        %v772 = vadd.f32 0.0, %v771
        %773 = vdwg.mxu0
        %v774 = vsel %vm571, %v772, -inf
        %775 = vmax.xlane.f32.xlu0 %v774
        %v776 = vpop.xlane.xlu0 %775
        %v777 = vsub.f32 %v772, %v776
        %v778 = vmul.f32 %v777, 1.442695
        %v779 = vpow.pop %v778
        %v780 = vsel %vm571, %v779, 0.0
        %781 = vadd.xlane.f32.xlu0 %v780
        %v782 = vpop.xlane.xlu0 %781
        %v783 = vrcp.pop %v782
        %v784 = vmul.f32 %v779, %v783
        %785 = vrot.lane.b32.xlu0 %v566, 48
        %v786 = vpop.permute.xlu0 %785
        %v789 = vsel %vm571, %v784, 0
        %791 = vmatpush.msra.mxu0 0.0
        %792 = vmatpush.msra.mxu0 0.0
        %793 = vmatpush.msra.mxu0 0.0
        %794 = vmatpush.msra.mxu0 0.0
        %795 = vmatpush.msra.mxu0 0.0
        %796 = vmatpush.msra.mxu0 0.0
        %797 = vmatpush.msra.mxu0 0.0
        %798 = vmatpush.msra.mxu0 0.0
        %799 = vmatpush.msra.mxu0 0.0
        %800 = vmatpush.msra.mxu0 0.0
        %801 = vmatpush.msra.mxu0 0.0
        %802 = vmatpush.msra.mxu0 0.0
        %803 = vmatpush.msra.mxu0 0.0
        %804 = vmatpush.msra.mxu0 0.0
        %805 = vmatpush.msra.mxu0 0.0
        %806 = vmatpush.msra.mxu0 %v786
        %807 = vmatmul.f32.gmra.mxu0 %v789
        %v808 = vpop.f32.mrf.mxu0
        %v809 = vadd.f32 0.0, %v808
        %810 = vdwg.mxu0
        %v811 = vld [vmem:[%s4 + $0x10] sm:$0xff]
        %v813 = vsel %vm571, %v809, 0
        %815 = vmatpush.msra.mxu0 0.0
        %816 = vmatpush.msra.mxu0 0.0
        %817 = vmatpush.msra.mxu0 0.0
        %818 = vmatpush.msra.mxu0 0.0
        %819 = vmatpush.msra.mxu0 0.0
        %820 = vmatpush.msra.mxu0 0.0
        %821 = vmatpush.msra.mxu0 0.0
        %822 = vmatpush.msra.mxu0 0.0
        %823 = vmatpush.msra.mxu0 0.0
        %824 = vmatpush.msra.mxu0 0.0
        %825 = vmatpush.msra.mxu0 0.0
        %826 = vmatpush.msra.mxu0 0.0
        %827 = vmatpush.msra.mxu0 0.0
        %828 = vmatpush.msra.mxu0 0.0
        %829 = vmatpush.msra.mxu0 0.0
        %830 = vmatpush.msra.mxu0 %v811
        %831 = vmatmul.f32.gmra.mxu0 %v813
        %v832 = vpop.f32.mrf.mxu0
        %v833 = vadd.f32 0.0, %v832
        %834 = vdwg.mxu0
        %v835 = vadd.f32 %v744, %v833
        %836 = vrot.lane.b32.xlu0 %v566, 104
        %v837 = vpop.permute.xlu0 %836
        %838 = vrot.lane.b32.xlu0 %v566, 72
        %v839 = vpop.permute.xlu0 %838
        %v840 = vsel %vm571, %v837, 0
        %v842 = vsel %vm571, %v839, 0
        %844 = vmatpush.xpose.msra.mxu0 0.0
        %845 = vmatpush.xpose.msra.mxu0 0.0
        %846 = vmatpush.xpose.msra.mxu0 0.0
        %847 = vmatpush.xpose.msra.mxu0 0.0
        %848 = vmatpush.xpose.msra.mxu0 0.0
        %849 = vmatpush.xpose.msra.mxu0 0.0
        %850 = vmatpush.xpose.msra.mxu0 0.0
        %851 = vmatpush.xpose.msra.mxu0 0.0
        %852 = vmatpush.xpose.msra.mxu0 0.0
        %853 = vmatpush.xpose.msra.mxu0 0.0
        %854 = vmatpush.xpose.msra.mxu0 0.0
        %855 = vmatpush.xpose.msra.mxu0 0.0
        %856 = vmatpush.xpose.msra.mxu0 0.0
        %857 = vmatpush.xpose.msra.mxu0 0.0
        %858 = vmatpush.xpose.msra.mxu0 0.0
        %859 = vmatpush.xpose.msra.mxu0 %v842
        %860 = vmatmul.f32.gmra.mxu0 %v840
        %v861 = vpop.f32.mrf.mxu0
        %v862 = vadd.f32 0.0, %v861
        %863 = vdwg.mxu0
        %v864 = vsel %vm571, %v862, -inf
        %865 = vmax.xlane.f32.xlu0 %v864
        %v866 = vpop.xlane.xlu0 %865
        %v867 = vsub.f32 %v862, %v866
        %v868 = vmul.f32 %v867, 1.442695
        %v869 = vpow.pop %v868
        %v870 = vsel %vm571, %v869, 0.0
        %871 = vadd.xlane.f32.xlu0 %v870
        %v872 = vpop.xlane.xlu0 %871
        %v873 = vrcp.pop %v872
        %v874 = vmul.f32 %v869, %v873
        %875 = vrot.lane.b32.xlu0 %v566, 40
        %v876 = vpop.permute.xlu0 %875
        %v879 = vsel %vm571, %v874, 0
        %881 = vmatpush.msra.mxu0 0.0
        %882 = vmatpush.msra.mxu0 0.0
        %883 = vmatpush.msra.mxu0 0.0
        %884 = vmatpush.msra.mxu0 0.0
        %885 = vmatpush.msra.mxu0 0.0
        %886 = vmatpush.msra.mxu0 0.0
        %887 = vmatpush.msra.mxu0 0.0
        %888 = vmatpush.msra.mxu0 0.0
        %889 = vmatpush.msra.mxu0 0.0
        %890 = vmatpush.msra.mxu0 0.0
        %891 = vmatpush.msra.mxu0 0.0
        %892 = vmatpush.msra.mxu0 0.0
        %893 = vmatpush.msra.mxu0 0.0
        %894 = vmatpush.msra.mxu0 0.0
        %895 = vmatpush.msra.mxu0 0.0
        %896 = vmatpush.msra.mxu0 %v876
        %897 = vmatmul.f32.gmra.mxu0 %v879
        %v898 = vpop.f32.mrf.mxu0
        %v899 = vadd.f32 0.0, %v898
        %900 = vdwg.mxu0
        %v901 = vld [vmem:[%s4 + $0x18] sm:$0xff]
        %v903 = vsel %vm571, %v899, 0
        %905 = vmatpush.msra.mxu0 0.0
        %906 = vmatpush.msra.mxu0 0.0
        %907 = vmatpush.msra.mxu0 0.0
        %908 = vmatpush.msra.mxu0 0.0
        %909 = vmatpush.msra.mxu0 0.0
        %910 = vmatpush.msra.mxu0 0.0
        %911 = vmatpush.msra.mxu0 0.0
        %912 = vmatpush.msra.mxu0 0.0
        %913 = vmatpush.msra.mxu0 0.0
        %914 = vmatpush.msra.mxu0 0.0
        %915 = vmatpush.msra.mxu0 0.0
        %916 = vmatpush.msra.mxu0 0.0
        %917 = vmatpush.msra.mxu0 0.0
        %918 = vmatpush.msra.mxu0 0.0
        %919 = vmatpush.msra.mxu0 0.0
        %920 = vmatpush.msra.mxu0 %v901
        %921 = vmatmul.f32.gmra.mxu0 %v903
        %v922 = vpop.f32.mrf.mxu0
        %v923 = vadd.f32 0.0, %v922
        %924 = vdwg.mxu0
        %v925 = vadd.f32 %v835, %v923
        %v926 = vadd.f32 %v500, %v925
        %v927 = vld [vmem:[%s5] sm:$0x1]
        %v929 = vperm.slane %v927, 0
        %v931 = vadd.f32 %v926, %v929
        %v932 = vld [vmem:[%s6] sm:$0x1]
        %v933 = vld [vmem:[%s7] sm:$0x1]
        %v934 = vsel %vm503, %v931, 0.0
        %935 = vadd.xlane.f32.xlu0 %v934
        %v936 = vpop.xlane.xlu0 %935
        %v937 = vmul.f32 %v936, %v513
        %v938 = vsub.f32 %v931, %v937
        %v939 = vmul.f32 %v938, %v938
        %v940 = vsel %vm503, %v939, 0.0
        %941 = vadd.xlane.f32.xlu0 %v940
        %v942 = vpop.xlane.xlu0 %941
        %v943 = vmul.f32 %v942, %v513
        %v944 = vadd.f32 %v943, 1e-05
        %v945 = vrsqrt.pop %v944
        %v946 = vmul.f32 %v945, %v944
        %v947 = vmul.f32 %v946, %v945
        %v948 = vmul.f32 0.5, %v947
        %v949 = vsub.f32 1.5, %v948
        %v950 = vmul.f32 %v945, %v949
        %vm951 = vweird.f32 %v944
        %vm952 = vweird.f32 %v945
        %vm953 = vmor %vm951, %vm952
        %v954 = vsel %vm953, %v945, %v950
        %v955 = vmul.f32 %v938, %v954
        %v957 = vperm.slane %v932, 0
        %v959 = vmul.f32 %v955, %v957
        %v961 = vperm.slane %v933, 0
        %v963 = vadd.f32 %v959, %v961
        %v964 = vld [vmem:[%s8] sm:$0xff]
        %v965 = vld [vmem:[%s8 + $0x8] sm:$0xff]
        %v966 = vld [vmem:[%s8 + $0x10] sm:$0xff]
        %v967 = vld [vmem:[%s8 + $0x18] sm:$0xff]
        %v968 = vld [vmem:[%s9] sm:$0x1]
        %v970 = vperm.slane %v968, 0
        %v973 = vsel %vm503, %v963, 0
        %975 = vmatpush.msra.mxu0 0.0
        %976 = vmatpush.msra.mxu0 0.0
        %977 = vmatpush.msra.mxu0 0.0
        %978 = vmatpush.msra.mxu0 0.0
        %979 = vmatpush.msra.mxu0 0.0
        %980 = vmatpush.msra.mxu0 0.0
        %981 = vmatpush.msra.mxu0 0.0
        %982 = vmatpush.msra.mxu0 0.0
        %983 = vmatpush.msra.mxu0 0.0
        %984 = vmatpush.msra.mxu0 0.0
        %985 = vmatpush.msra.mxu0 0.0
        %986 = vmatpush.msra.mxu0 0.0
        %987 = vmatpush.msra.mxu0 %v967
        %988 = vmatpush.msra.mxu0 %v966
        %989 = vmatpush.msra.mxu0 %v965
        %990 = vmatpush.msra.mxu0 %v964
        %991 = vmatmul.f32.gmra.mxu0 %v973
        %v992 = vpop.f32.mrf.mxu0
        %v993 = vadd.f32 %v970, %v992
        %994 = vdwg.mxu0
        %v995 = vtanh.pop %v993
        %v996 = vld [vmem:[%s10] sm:$0xff]
        %v997 = vld [vmem:[%s10 + $0x8] sm:$0xff]
        %v998 = vld [vmem:[%s10 + $0x10] sm:$0xff]
        %v999 = vld [vmem:[%s10 + $0x18] sm:$0xff]
        %v1000 = vld [vmem:[%s10 + $0x20] sm:$0xff]
        %v1001 = vld [vmem:[%s10 + $0x28] sm:$0xff]
        %v1002 = vld [vmem:[%s10 + $0x30] sm:$0xff]
        %v1003 = vld [vmem:[%s10 + $0x38] sm:$0xff]
        %vm1004 = vcmask 523264
        %v1006 = vsel %vm1004, %v995, 0
        %1008 = vmatpush.msra.mxu0 0.0
        %1009 = vmatpush.msra.mxu0 0.0
        %1010 = vmatpush.msra.mxu0 0.0
        %1011 = vmatpush.msra.mxu0 0.0
        %1012 = vmatpush.msra.mxu0 0.0
        %1013 = vmatpush.msra.mxu0 0.0
        %1014 = vmatpush.msra.mxu0 0.0
        %1015 = vmatpush.msra.mxu0 0.0
        %1016 = vmatpush.msra.mxu0 %v1003
        %1017 = vmatpush.msra.mxu0 %v1002
        %1018 = vmatpush.msra.mxu0 %v1001
        %1019 = vmatpush.msra.mxu0 %v1000
        %1020 = vmatpush.msra.mxu0 %v999
        %1021 = vmatpush.msra.mxu0 %v998
        %1022 = vmatpush.msra.mxu0 %v997
        %1023 = vmatpush.msra.mxu0 %v996
        %1024 = vmatmul.f32.gmra.mxu0 %v1006
        %v1025 = vpop.f32.mrf.mxu0
        %v1026 = vadd.f32 0.0, %v1025
        %1027 = vdwg.mxu0
        %v1028 = vadd.f32 %v931, %v1026
        %v1029 = vld [vmem:[%s11] sm:$0x1]
        %v1031 = vperm.slane %v1029, 0
        %v1033 = vadd.f32 %v1028, %v1031
        %1034 = vst.msk [vmem:[%s499] sm:$0xff] %vm503, %v1033
        %s1035 = sand.u32 %s339, 1
        %s1036 = scalar_lea.sflag [#allocation4], %s1035
        %s1037 = sand.u32 %s339, 1
        %s1038 = smul.addr %s1037, 8
        %s1039 = scalar_lea.vmem [#allocation7], %s1038
        // Predicated region
        $region85: #{tpu_custom_call.1} parent=75 // pred_check
          %p1040 = pneg %p349
        $region86: #{tpu_custom_call.1} parent=75 // pred_check_branch
          %1042 = sbr.rel (%p1040) target = $region88
        $region87: #{tpu_custom_call.1} parent=75 // pred_region
          %1044 = vsyncadd %s1036, 0
          %s1045 = smul.addr %s32, 8
          %s1046 = scalar_lea.hbm %s14, %s1045
          %s1048 = sshll.u32 %s1039, 4
          %s1049 = int_to_ptr.vmem [resolvable:$true] %s1048
          %s1050 = sshll.u32 %s1046, 4
          %s1051 = int_to_ptr.hbm [resolvable:$true] %s1050
          %1053 = dma.vmem_to_hbm [thread:$0]  %s1049, 128, %s1051, %s1036
        $region88: #{tpu_custom_call.1} parent=75 // pred_fallthru
          _
      $region76: #{tpu_custom_call.1} parent=5 // pred_fallthru
        _
      %p1054 = scmp.le.s32.totalorder 2, %s27
      // Predicated region
      $region89: #{tpu_custom_call.1} parent=5 // pred_check
        %p1055 = pneg %p1054
      $region90: #{tpu_custom_call.1} parent=5 // pred_check_branch
        %1057 = sbr.rel (%p1055) target = $region92
      $region91: #{tpu_custom_call.1} parent=5 // pred_region
        %s1058 = ssub.s32 %s27, 2
        // Predicated region
        $region93: #{tpu_custom_call.1} parent=91 // pred_check
          %p1059 = pneg %p355
        $region94: #{tpu_custom_call.1} parent=91 // pred_check_branch
          %1061 = sbr.rel (%p1059) target = $region96
        $region95: #{tpu_custom_call.1} parent=91 // pred_region
          %s1062 = sand.u32 %s340, 1
          %s1063 = scalar_lea.sflag [#allocation4], %s1062
          %s1064 = sand.u32 %s340, 1
          %s1065 = smul.addr %s1064, 8
          %s1066 = scalar_lea.vmem [#allocation7], %s1065
          %1068 = dma.done %s1063, 128
        $region96: #{tpu_custom_call.1} parent=91 // pred_fallthru
          _
      $region92: #{tpu_custom_call.1} parent=5 // pred_fallthru
        _
    $region6: #{tpu_custom_call.1} parent=1 // loop_footer
      %s31 = sadd.s32 1, %s27
    $region7: #{tpu_custom_call.1} parent=1 // loop_footer_branch
      %26 = sbr.rel target = $region3
    $region8: #{tpu_custom_call.1} parent=1 // loop_exit
      _
    %1069 = vsyncpa [#allocation3], 1
    %s1070 = scalar_lea.sflag [#allocation3], 1
    %1071 = vsyncpa %s1070, 1
    %1072 = vsyncpa [#allocation6], 1
    %1073 = vsyncpa [#allocation4], 1
    %s1074 = scalar_lea.sflag [#allocation4], 1
    %1075 = vsyncpa %s1074, 1

</llo_original>
